<compile_context>
chip_gen: v6e
topology: v6e:2x2x1
jax: 0.10.0
libtpu: 0.0.40
codegen_flags: <defaults>
</compile_context>

<pallas_src>
import functools

import jax
import jax.numpy as jnp
from jax import lax
from jax.experimental import pallas as pl
from jax.experimental.pallas import tpu as pltpu

EPS = 1e-6


def _rmsnorm(x, w):
    # x: (..., D), w: (D,)
    ms = jnp.mean(x * x, axis=-1, keepdims=True)
    return x * lax.rsqrt(ms + EPS) * w


# --------------------------------------------------------------------------
# Fused kernel: RMSNorm -> packed QLSTM gate matmul -> vectorized scan
#               -> output gate -> residual -> RMSNorm -> SwiGLU FFN -> residual.
# One grid step processes `block_b` batch rows.
# --------------------------------------------------------------------------
def qlstm_block_kernel(x_ref, hid_ref,
                       wn1_ref, wg_ref, bg_ref,
                       wn2_ref, w12_ref, b12_ref, w3_ref, b3_ref,
                       y_ref, hout_ref):
    Bt, L, D = x_ref.shape
    F = w3_ref.shape[0]

    x = x_ref[...]                                     # (Bt, L, D) f32
    xn = _rmsnorm(x, wn1_ref[0])                       # norm_qlstm

    # ---- fused gate projections: one (Bt*L, D) @ (D, 4D) bf16 matmul ----
    xb = xn.reshape(Bt * L, D).astype(jnp.bfloat16)
    gates = jnp.dot(xb, wg_ref[...], preferred_element_type=jnp.float32)
    gates = gates.reshape(Bt, L, 4 * D) + bg_ref[0]

    f = jax.nn.sigmoid(gates[..., 0 * D:1 * D])        # forget gate
    i = jnp.tanh(gates[..., 1 * D:2 * D]) * \
        jax.nn.sigmoid(gates[..., 2 * D:3 * D])        # input * input gate
    og = jax.nn.sigmoid(gates[..., 3 * D:4 * D])       # output gate

    # ---- vectorized associative scan of h_t = f_t * h_{t-1} + i_t ----
    # Inclusive prefix of (f, i) under (a2,b2) o (a1,b1) = (a1*a2, a2*b1+b2).
    # Afterwards A = cumprod(f) and Bv = scan(f, i), so h = A*h_init + Bv,
    # identical to the reference `h_inner + hidden * forget.cumprod(1)`.
    A, Bv = f, i
    s = 1
    while s < L:                                       # log2(L) static steps
        A_sh = jnp.concatenate(
            [jnp.ones((Bt, s, D), A.dtype), A[:, :L - s]], axis=1)
        B_sh = jnp.concatenate(
            [jnp.zeros((Bt, s, D), Bv.dtype), Bv[:, :L - s]], axis=1)
        A, Bv = A * A_sh, A * B_sh + Bv
        s *= 2

    h = A * hid_ref[...] + Bv                          # (Bt, L, D)
    y = jnp.tanh(h) * og + x                           # dropout==identity, residual

    # ---- SwiGLU FFN: fused (D, 2F) matmul, then (F, D) ----
    yn = _rmsnorm(y, wn2_ref[0])                       # norm_ffn
    yb = yn.reshape(Bt * L, D).astype(jnp.bfloat16)
    hg = jnp.dot(yb, w12_ref[...], preferred_element_type=jnp.float32)
    hg = hg.reshape(Bt, L, 2 * F) + b12_ref[0]
    u = hg[..., :F]
    g = hg[..., F:]
    z = u * (g * jax.nn.sigmoid(g))                    # SiLU gating
    z = jnp.dot(z.reshape(Bt * L, F).astype(jnp.bfloat16), w3_ref[...],
                preferred_element_type=jnp.float32).reshape(Bt, L, D)
    z = z + b3_ref[0]

    y_ref[...] = z + y                                 # dropout==identity, residual
    hout_ref[...] = h[:, L - 1:L, :]


# --------------------------------------------------------------------------
# Wrapper
# --------------------------------------------------------------------------
def qlstm_block_forward(x, hidden, p, *, block_b=None):
    B, L, D = x.shape
    F = p["w_ffn1"].shape[1]

    if block_b is None:
        # Largest divisor of B whose tile gives a reasonable MXU M dimension.
        block_b = 1
        for cand in range(B, 0, -1):
            if B % cand == 0 and cand * L <= 256:
                block_b = cand
                break
    assert B % block_b == 0
    grid = (B // block_b,)

    wdt = jnp.bfloat16
    # Pack gate / FFN weights (trace-time, fused by XLA).
    w_gates = jnp.concatenate([p["w_forget"], p["w_input"],
                               p["w_input_gate"], p["w_output_gate"]],
                              axis=1).astype(wdt)                  # (D, 4D)
    b_gates = jnp.concatenate([p["b_forget"], p["b_input"],
                               p["b_input_gate"], p["b_output_gate"]])[None, :]
    w_ffn12 = jnp.concatenate([p["w_ffn1"], p["w_ffn_act"]],
                              axis=1).astype(wdt)                  # (D, 2F)
    b_ffn12 = jnp.concatenate([p["b_ffn1"], p["b_ffn_act"]])[None, :]
    w_ffn3 = p["w_ffn_out"].astype(wdt)                            # (F, D)
    b_ffn3 = p["b_ffn_out"][None, :]
    wn1 = p["w_norm_qlstm"][None, :]
    wn2 = p["w_norm_ffn"][None, :]

    x_spec = pl.BlockSpec((block_b, L, D), lambda b: (b, 0, 0))
    h_spec = pl.BlockSpec((block_b, 1, D), lambda b: (b, 0, 0))

    def full(shape):
        return pl.BlockSpec(shape, lambda b: (0,) * len(shape))

    # Advisory cost estimate + VMEM budget.
    flops = int(2 * B * L * D * (4 * D)
                + 2 * B * L * D * (2 * F)
                + 2 * B * L * F * D
                + 20 * B * L * D)
    transcendentals = int(B * L * (6 * D + F) + 2 * B * L)
    bytes_accessed = int(4 * (2 * B * L * D + 2 * B * D)
                         + 2 * (w_gates.size + w_ffn12.size + w_ffn3.size)
                         + 4 * (b_gates.size + b_ffn12.size + b_ffn3.size
                                + wn1.size + wn2.size))
    weight_bytes = (2 * (w_gates.size + w_ffn12.size + w_ffn3.size)
                    + 4 * (b_gates.size + b_ffn12.size + b_ffn3.size
                           + wn1.size + wn2.size))
    tile_bytes = 4 * block_b * L * (8 * D + 3 * F)
    vmem_limit = int(min(max(2 * weight_bytes + 4 * tile_bytes + (8 << 20),
                             32 << 20), 100 << 20))

    out, hout = pl.pallas_call(
        qlstm_block_kernel,
        grid=grid,
        in_specs=[x_spec, h_spec,
                  full((1, D)), full((D, 4 * D)), full((1, 4 * D)),
                  full((1, D)), full((D, 2 * F)), full((1, 2 * F)),
                  full((F, D)), full((1, D))],
        out_specs=[x_spec, h_spec],
        out_shape=[jax.ShapeDtypeStruct((B, L, D), jnp.float32),
                   jax.ShapeDtypeStruct((B, 1, D), jnp.float32)],
        compiler_params=pltpu.CompilerParams(
            dimension_semantics=("parallel",),
            vmem_limit_bytes=vmem_limit),
        cost_estimate=pl.CostEstimate(flops=flops,
                                      transcendentals=transcendentals,
                                      bytes_accessed=bytes_accessed),
    )(x, hidden[:, None, :],
      wn1, w_gates, b_gates,
      wn2, w_ffn12, b_ffn12, w_ffn3, b_ffn3)

    return out, hout[:, 0, :]


# --------------------------------------------------------------------------
# Pure-JAX reference for validation
# --------------------------------------------------------------------------
def reference_forward(x, hidden, p):
    def rms(v, w):
        return v * lax.rsqrt(jnp.mean(v * v, -1, keepdims=True) + EPS) * w

    x_ = x
    xn = rms(x, p["w_norm_qlstm"])
    f = jax.nn.sigmoid(xn @ p["w_forget"] + p["b_forget"])
    i = jnp.tanh(xn @ p["w_input"] + p["b_input"]) * \
        jax.nn.sigmoid(xn @ p["w_input_gate"] + p["b_input_gate"])
    og = jax.nn.sigmoid(xn @ p["w_output_gate"] + p["b_output_gate"])

    def step(h, fi):
        ft, it = fi
        h = ft * h + it
        return h, h

    h_last, hs = lax.scan(step, hidden,
                          (jnp.swapaxes(f, 0, 1), jnp.swapaxes(i, 0, 1)))
    h = jnp.swapaxes(hs, 0, 1)
    y = jnp.tanh(h) * og + x_

    x_ = y
    xn = rms(y, p["w_norm_ffn"])
    z = (xn @ p["w_ffn1"] + p["b_ffn1"]) * \
        jax.nn.silu(xn @ p["w_ffn_act"] + p["b_ffn_act"])
    z = z @ p["w_ffn_out"] + p["b_ffn_out"]
    return z + x_, h_last


def init_params(key, dim, dim_ff_hidden):
    keys = jax.random.split(key, 16)
    s_d = 1.0 / jnp.sqrt(dim)
    s_f = 1.0 / jnp.sqrt(dim_ff_hidden)
    p = {
        "w_norm_qlstm": jnp.ones((dim,), jnp.float32),
        "w_norm_ffn": jnp.ones((dim,), jnp.float32),
        "w_forget": jax.random.normal(keys[0], (dim, dim), jnp.float32) * s_d,
        "b_forget": jax.random.normal(keys[1], (dim,), jnp.float32) * s_d,
        "w_input": jax.random.normal(keys[2], (dim, dim), jnp.float32) * s_d,
        "b_input": jax.random.normal(keys[3], (dim,), jnp.float32) * s_d,
        "w_input_gate": jax.random.normal(keys[4], (dim, dim), jnp.float32) * s_d,
        "b_input_gate": jax.random.normal(keys[5], (dim,), jnp.float32) * s_d,
        "w_output_gate": jax.random.normal(keys[6], (dim, dim), jnp.float32) * s_d,
        "b_output_gate": jax.random.normal(keys[7], (dim,), jnp.float32) * s_d,
        "w_ffn1": jax.random.normal(keys[8], (dim, dim_ff_hidden), jnp.float32) * s_d,
        "b_ffn1": jax.random.normal(keys[9], (dim_ff_hidden,), jnp.float32) * s_d,
        "w_ffn_act": jax.random.normal(keys[10], (dim, dim_ff_hidden), jnp.float32) * s_d,
        "b_ffn_act": jax.random.normal(keys[11], (dim_ff_hidden,), jnp.float32) * s_d,
        "w_ffn_out": jax.random.normal(keys[12], (dim_ff_hidden, dim), jnp.float32) * s_f,
        "b_ffn_out": jax.random.normal(keys[13], (dim,), jnp.float32) * s_f,
    }
    return p


if __name__ == "__main__":
    # Lane-dense D (multiple of 128), L multiple of 8, block_b=2 -> grid=(2,)
    # so the batch-tiled index maps and megacore-parallel axis are exercised.
    B, L, D, FF = 4, 16, 128, 256
    key = jax.random.PRNGKey(0)
    k_x, k_h, k_p = jax.random.split(key, 3)

    x = jax.random.normal(k_x, (B, L, D), jnp.float32)
    hidden = jax.random.normal(k_h, (B, D), jnp.float32)
    params = init_params(k_p, D, FF)

    fwd = jax.jit(functools.partial(qlstm_block_forward, block_b=2))
    out, hid_out = fwd(x, hidden, params)
    out = jax.block_until_ready(out)
    hid_out = jax.block_until_ready(hid_out)

    ref_out, ref_hid = reference_forward(x, hidden, params)
    assert out.shape == (B, L, D) and hid_out.shape == (B, D)
    # bf16 matmuls (f32 accumulation) -> slightly looser tolerance than pure f32.
    assert jnp.allclose(out, ref_out, rtol=5e-2, atol=5e-2)
    assert jnp.allclose(hid_out, ref_hid, rtol=5e-2, atol=5e-2)

    print("KERNEL_OK")
</pallas_src>

<mosaic_0001>
module attributes {stable_mosaic.version = 11 : i64} {
  func.func @qlstm_block_kernel(%arg0: i32, %arg1: memref<2x16x128xf32, #tpu.memory_space<vmem>>, %arg2: memref<2x1x128xf32, #tpu.memory_space<vmem>>, %arg3: memref<1x128xf32, #tpu.memory_space<vmem>>, %arg4: memref<128x512xbf16, #tpu.memory_space<vmem>>, %arg5: memref<1x512xf32, #tpu.memory_space<vmem>>, %arg6: memref<1x128xf32, #tpu.memory_space<vmem>>, %arg7: memref<128x512xbf16, #tpu.memory_space<vmem>>, %arg8: memref<1x512xf32, #tpu.memory_space<vmem>>, %arg9: memref<256x128xbf16, #tpu.memory_space<vmem>>, %arg10: memref<1x128xf32, #tpu.memory_space<vmem>>, %arg11: memref<2x16x128xf32, #tpu.memory_space<vmem>>, %arg12: memref<2x1x128xf32, #tpu.memory_space<vmem>>) attributes {dimension_semantics = [#tpu.dimension_semantics<parallel>], iteration_bounds = array<i64: 2>, scalar_prefetch = 0 : i64, scratch_operands = 0 : i64, tpu.core_type = #tpu.core_type<tc>, window_params = [{transform_indices = @transform_0, window_bounds = array<i64: 2, 16, 128>}, {transform_indices = @transform_1, window_bounds = array<i64: 2, 1, 128>}, {pipeline_mode = #tpu.pipeline_mode<synchronous>, transform_indices = @transform_2, window_bounds = array<i64: 1, 128>}, {pipeline_mode = #tpu.pipeline_mode<synchronous>, transform_indices = @transform_3, window_bounds = array<i64: 128, 512>}, {pipeline_mode = #tpu.pipeline_mode<synchronous>, transform_indices = @transform_4, window_bounds = array<i64: 1, 512>}, {pipeline_mode = #tpu.pipeline_mode<synchronous>, transform_indices = @transform_5, window_bounds = array<i64: 1, 128>}, {pipeline_mode = #tpu.pipeline_mode<synchronous>, transform_indices = @transform_6, window_bounds = array<i64: 128, 512>}, {pipeline_mode = #tpu.pipeline_mode<synchronous>, transform_indices = @transform_7, window_bounds = array<i64: 1, 512>}, {pipeline_mode = #tpu.pipeline_mode<synchronous>, transform_indices = @transform_8, window_bounds = array<i64: 256, 128>}, {pipeline_mode = #tpu.pipeline_mode<synchronous>, transform_indices = @transform_9, window_bounds = array<i64: 1, 128>}, {transform_indices = @transform_10, window_bounds = array<i64: 2, 16, 128>}, {transform_indices = @transform_11, window_bounds = array<i64: 2, 1, 128>}]} {
    %c0 = arith.constant 0 : index
    %c0_0 = arith.constant 0 : index
    %c0_1 = arith.constant 0 : index
    %0 = vector.load %arg1[%c0, %c0_0, %c0_1] : memref<2x16x128xf32, #tpu.memory_space<vmem>>, vector<2x16x128xf32>
    %c0_2 = arith.constant 0 : index
    %c0_3 = arith.constant 0 : index
    %1 = vector.load %arg3[%c0_2, %c0_3] : memref<1x128xf32, #tpu.memory_space<vmem>>, vector<1x128xf32>
    %2 = vector.shape_cast %1 : vector<1x128xf32> to vector<128xf32>
    %3 = arith.mulf %0, %0 : vector<2x16x128xf32>
    %cst = arith.constant dense<0.000000e+00> : vector<2x16xf32>
    %4 = vector.multi_reduction <add>, %3, %cst [2] : vector<2x16x128xf32> to vector<2x16xf32>
    %5 = vector.shape_cast %4 : vector<2x16xf32> to vector<2x16x1xf32>
    %cst_4 = arith.constant 1.280000e+02 : f32
    %6 = vector.broadcast %cst_4 : f32 to vector<2x16x1xf32>
    %7 = arith.divf %5, %6 : vector<2x16x1xf32>
    %cst_5 = arith.constant 9.99999997E-7 : f32
    %8 = vector.broadcast %cst_5 : f32 to vector<2x16x1xf32>
    %9 = arith.addf %7, %8 : vector<2x16x1xf32>
    %10 = math.rsqrt %9 : vector<2x16x1xf32>
    %11 = vector.broadcast %10 : vector<2x16x1xf32> to vector<2x16x128xf32>
    %12 = arith.mulf %0, %11 : vector<2x16x128xf32>
    %13 = vector.shape_cast %2 : vector<128xf32> to vector<1x1x128xf32>
    %14 = vector.broadcast %13 : vector<1x1x128xf32> to vector<2x16x128xf32>
    %15 = arith.mulf %12, %14 : vector<2x16x128xf32>
    %16 = vector.shape_cast %15 : vector<2x16x128xf32> to vector<32x128xf32>
    %17 = arith.truncf %16 : vector<32x128xf32> to vector<32x128xbf16>
    %c0_6 = arith.constant 0 : index
    %c0_7 = arith.constant 0 : index
    %18 = vector.load %arg4[%c0_6, %c0_7] : memref<128x512xbf16, #tpu.memory_space<vmem>>, vector<128x512xbf16>
    %cst_8 = arith.constant dense<0.000000e+00> : vector<32x512xf32>
    %19 = tpu.matmul %17, %18, %cst_8 {dimension_numbers = #tpu.dot_dimension_numbers<[1], [0], [0], [1], [0, 0, 1, 1], [], []>} : vector<32x128xbf16>, vector<128x512xbf16>, vector<32x512xf32> -> vector<32x512xf32>
    %20 = vector.shape_cast %19 : vector<32x512xf32> to vector<2x16x512xf32>
    %c0_9 = arith.constant 0 : index
    %c0_10 = arith.constant 0 : index
    %21 = vector.load %arg5[%c0_9, %c0_10] : memref<1x512xf32, #tpu.memory_space<vmem>>, vector<1x512xf32>
    %22 = vector.shape_cast %21 : vector<1x512xf32> to vector<512xf32>
    %23 = vector.shape_cast %22 : vector<512xf32> to vector<1x1x512xf32>
    %24 = vector.broadcast %23 : vector<1x1x512xf32> to vector<2x16x512xf32>
    %25 = arith.addf %20, %24 : vector<2x16x512xf32>
    %26 = vector.extract_strided_slice %25 {offsets = [0, 0, 0], sizes = [2, 16, 128], strides = [1, 1, 1]} : vector<2x16x512xf32> to vector<2x16x128xf32>
    %27 = arith.negf %26 : vector<2x16x128xf32>
    %28 = math.exp %27 : vector<2x16x128xf32>
    %cst_11 = arith.constant 1.000000e+00 : f32
    %29 = vector.broadcast %cst_11 : f32 to vector<2x16x128xf32>
    %30 = arith.addf %29, %28 : vector<2x16x128xf32>
    %31 = arith.divf %29, %30 : vector<2x16x128xf32>
    %32 = vector.extract_strided_slice %25 {offsets = [0, 0, 128], sizes = [2, 16, 128], strides = [1, 1, 1]} : vector<2x16x512xf32> to vector<2x16x128xf32>
    %33 = math.tanh %32 : vector<2x16x128xf32>
    %34 = vector.extract_strided_slice %25 {offsets = [0, 0, 256], sizes = [2, 16, 128], strides = [1, 1, 1]} : vector<2x16x512xf32> to vector<2x16x128xf32>
    %35 = arith.negf %34 : vector<2x16x128xf32>
    %36 = math.exp %35 : vector<2x16x128xf32>
    %cst_12 = arith.constant 1.000000e+00 : f32
    %37 = vector.broadcast %cst_12 : f32 to vector<2x16x128xf32>
    %38 = arith.addf %37, %36 : vector<2x16x128xf32>
    %39 = arith.divf %37, %38 : vector<2x16x128xf32>
    %40 = arith.mulf %33, %39 : vector<2x16x128xf32>
    %41 = vector.extract_strided_slice %25 {offsets = [0, 0, 384], sizes = [2, 16, 128], strides = [1, 1, 1]} : vector<2x16x512xf32> to vector<2x16x128xf32>
    %42 = arith.negf %41 : vector<2x16x128xf32>
    %43 = math.exp %42 : vector<2x16x128xf32>
    %cst_13 = arith.constant 1.000000e+00 : f32
    %44 = vector.broadcast %cst_13 : f32 to vector<2x16x128xf32>
    %45 = arith.addf %44, %43 : vector<2x16x128xf32>
    %46 = arith.divf %44, %45 : vector<2x16x128xf32>
    %cst_14 = arith.constant 1.000000e+00 : f32
    %47 = vector.broadcast %cst_14 : f32 to vector<2x1x128xf32>
    %48 = vector.extract_strided_slice %31 {offsets = [0, 0, 0], sizes = [2, 15, 128], strides = [1, 1, 1]} : vector<2x16x128xf32> to vector<2x15x128xf32>
    %49 = tpu.concatenate %47, %48 in 1 : vector<2x1x128xf32>, vector<2x15x128xf32> -> vector<2x16x128xf32>
    %cst_15 = arith.constant 0.000000e+00 : f32
    %50 = vector.broadcast %cst_15 : f32 to vector<2x1x128xf32>
    %51 = vector.extract_strided_slice %40 {offsets = [0, 0, 0], sizes = [2, 15, 128], strides = [1, 1, 1]} : vector<2x16x128xf32> to vector<2x15x128xf32>
    %52 = tpu.concatenate %50, %51 in 1 : vector<2x1x128xf32>, vector<2x15x128xf32> -> vector<2x16x128xf32>
    %53 = arith.mulf %31, %49 : vector<2x16x128xf32>
    %54 = arith.mulf %31, %52 : vector<2x16x128xf32>
    %55 = arith.addf %54, %40 : vector<2x16x128xf32>
    %cst_16 = arith.constant 1.000000e+00 : f32
    %56 = vector.broadcast %cst_16 : f32 to vector<2x2x128xf32>
    %57 = vector.extract_strided_slice %53 {offsets = [0, 0, 0], sizes = [2, 14, 128], strides = [1, 1, 1]} : vector<2x16x128xf32> to vector<2x14x128xf32>
    %58 = tpu.concatenate %56, %57 in 1 : vector<2x2x128xf32>, vector<2x14x128xf32> -> vector<2x16x128xf32>
    %cst_17 = arith.constant 0.000000e+00 : f32
    %59 = vector.broadcast %cst_17 : f32 to vector<2x2x128xf32>
    %60 = vector.extract_strided_slice %55 {offsets = [0, 0, 0], sizes = [2, 14, 128], strides = [1, 1, 1]} : vector<2x16x128xf32> to vector<2x14x128xf32>
    %61 = tpu.concatenate %59, %60 in 1 : vector<2x2x128xf32>, vector<2x14x128xf32> -> vector<2x16x128xf32>
    %62 = arith.mulf %53, %58 : vector<2x16x128xf32>
    %63 = arith.mulf %53, %61 : vector<2x16x128xf32>
    %64 = arith.addf %63, %55 : vector<2x16x128xf32>
    %cst_18 = arith.constant 1.000000e+00 : f32
    %65 = vector.broadcast %cst_18 : f32 to vector<2x4x128xf32>
    %66 = vector.extract_strided_slice %62 {offsets = [0, 0, 0], sizes = [2, 12, 128], strides = [1, 1, 1]} : vector<2x16x128xf32> to vector<2x12x128xf32>
    %67 = tpu.concatenate %65, %66 in 1 : vector<2x4x128xf32>, vector<2x12x128xf32> -> vector<2x16x128xf32>
    %cst_19 = arith.constant 0.000000e+00 : f32
    %68 = vector.broadcast %cst_19 : f32 to vector<2x4x128xf32>
    %69 = vector.extract_strided_slice %64 {offsets = [0, 0, 0], sizes = [2, 12, 128], strides = [1, 1, 1]} : vector<2x16x128xf32> to vector<2x12x128xf32>
    %70 = tpu.concatenate %68, %69 in 1 : vector<2x4x128xf32>, vector<2x12x128xf32> -> vector<2x16x128xf32>
    %71 = arith.mulf %62, %67 : vector<2x16x128xf32>
    %72 = arith.mulf %62, %70 : vector<2x16x128xf32>
    %73 = arith.addf %72, %64 : vector<2x16x128xf32>
    %cst_20 = arith.constant 1.000000e+00 : f32
    %74 = vector.broadcast %cst_20 : f32 to vector<2x8x128xf32>
    %75 = vector.extract_strided_slice %71 {offsets = [0, 0, 0], sizes = [2, 8, 128], strides = [1, 1, 1]} : vector<2x16x128xf32> to vector<2x8x128xf32>
    %76 = tpu.concatenate %74, %75 in 1 : vector<2x8x128xf32>, vector<2x8x128xf32> -> vector<2x16x128xf32>
    %cst_21 = arith.constant 0.000000e+00 : f32
    %77 = vector.broadcast %cst_21 : f32 to vector<2x8x128xf32>
    %78 = vector.extract_strided_slice %73 {offsets = [0, 0, 0], sizes = [2, 8, 128], strides = [1, 1, 1]} : vector<2x16x128xf32> to vector<2x8x128xf32>
    %79 = tpu.concatenate %77, %78 in 1 : vector<2x8x128xf32>, vector<2x8x128xf32> -> vector<2x16x128xf32>
    %80 = arith.mulf %71, %76 : vector<2x16x128xf32>
    %81 = arith.mulf %71, %79 : vector<2x16x128xf32>
    %82 = arith.addf %81, %73 : vector<2x16x128xf32>
    %c0_22 = arith.constant 0 : index
    %c0_23 = arith.constant 0 : index
    %c0_24 = arith.constant 0 : index
    %83 = vector.load %arg2[%c0_22, %c0_23, %c0_24] : memref<2x1x128xf32, #tpu.memory_space<vmem>>, vector<2x1x128xf32>
    %84 = vector.broadcast %83 : vector<2x1x128xf32> to vector<2x16x128xf32>
    %85 = arith.mulf %80, %84 : vector<2x16x128xf32>
    %86 = arith.addf %85, %82 : vector<2x16x128xf32>
    %87 = math.tanh %86 : vector<2x16x128xf32>
    %88 = arith.mulf %87, %46 : vector<2x16x128xf32>
    %89 = arith.addf %88, %0 : vector<2x16x128xf32>
    %c0_25 = arith.constant 0 : index
    %c0_26 = arith.constant 0 : index
    %90 = vector.load %arg6[%c0_25, %c0_26] : memref<1x128xf32, #tpu.memory_space<vmem>>, vector<1x128xf32>
    %91 = vector.shape_cast %90 : vector<1x128xf32> to vector<128xf32>
    %92 = arith.mulf %89, %89 : vector<2x16x128xf32>
    %cst_27 = arith.constant dense<0.000000e+00> : vector<2x16xf32>
    %93 = vector.multi_reduction <add>, %92, %cst_27 [2] : vector<2x16x128xf32> to vector<2x16xf32>
    %94 = vector.shape_cast %93 : vector<2x16xf32> to vector<2x16x1xf32>
    %cst_28 = arith.constant 1.280000e+02 : f32
    %95 = vector.broadcast %cst_28 : f32 to vector<2x16x1xf32>
    %96 = arith.divf %94, %95 : vector<2x16x1xf32>
    %cst_29 = arith.constant 9.99999997E-7 : f32
    %97 = vector.broadcast %cst_29 : f32 to vector<2x16x1xf32>
    %98 = arith.addf %96, %97 : vector<2x16x1xf32>
    %99 = math.rsqrt %98 : vector<2x16x1xf32>
    %100 = vector.broadcast %99 : vector<2x16x1xf32> to vector<2x16x128xf32>
    %101 = arith.mulf %89, %100 : vector<2x16x128xf32>
    %102 = vector.shape_cast %91 : vector<128xf32> to vector<1x1x128xf32>
    %103 = vector.broadcast %102 : vector<1x1x128xf32> to vector<2x16x128xf32>
    %104 = arith.mulf %101, %103 : vector<2x16x128xf32>
    %105 = vector.shape_cast %104 : vector<2x16x128xf32> to vector<32x128xf32>
    %106 = arith.truncf %105 : vector<32x128xf32> to vector<32x128xbf16>
    %c0_30 = arith.constant 0 : index
    %c0_31 = arith.constant 0 : index
    %107 = vector.load %arg7[%c0_30, %c0_31] : memref<128x512xbf16, #tpu.memory_space<vmem>>, vector<128x512xbf16>
    %cst_32 = arith.constant dense<0.000000e+00> : vector<32x512xf32>
    %108 = tpu.matmul %106, %107, %cst_32 {dimension_numbers = #tpu.dot_dimension_numbers<[1], [0], [0], [1], [0, 0, 1, 1], [], []>} : vector<32x128xbf16>, vector<128x512xbf16>, vector<32x512xf32> -> vector<32x512xf32>
    %109 = vector.shape_cast %108 : vector<32x512xf32> to vector<2x16x512xf32>
    %c0_33 = arith.constant 0 : index
    %c0_34 = arith.constant 0 : index
    %110 = vector.load %arg8[%c0_33, %c0_34] : memref<1x512xf32, #tpu.memory_space<vmem>>, vector<1x512xf32>
    %111 = vector.shape_cast %110 : vector<1x512xf32> to vector<512xf32>
    %112 = vector.shape_cast %111 : vector<512xf32> to vector<1x1x512xf32>
    %113 = vector.broadcast %112 : vector<1x1x512xf32> to vector<2x16x512xf32>
    %114 = arith.addf %109, %113 : vector<2x16x512xf32>
    %115 = vector.extract_strided_slice %114 {offsets = [0, 0, 0], sizes = [2, 16, 256], strides = [1, 1, 1]} : vector<2x16x512xf32> to vector<2x16x256xf32>
    %116 = vector.extract_strided_slice %114 {offsets = [0, 0, 256], sizes = [2, 16, 256], strides = [1, 1, 1]} : vector<2x16x512xf32> to vector<2x16x256xf32>
    %117 = arith.negf %116 : vector<2x16x256xf32>
    %118 = math.exp %117 : vector<2x16x256xf32>
    %cst_35 = arith.constant 1.000000e+00 : f32
    %119 = vector.broadcast %cst_35 : f32 to vector<2x16x256xf32>
    %120 = arith.addf %119, %118 : vector<2x16x256xf32>
    %121 = arith.divf %119, %120 : vector<2x16x256xf32>
    %122 = arith.mulf %116, %121 : vector<2x16x256xf32>
    %123 = arith.mulf %115, %122 : vector<2x16x256xf32>
    %124 = vector.shape_cast %123 : vector<2x16x256xf32> to vector<32x256xf32>
    %125 = arith.truncf %124 : vector<32x256xf32> to vector<32x256xbf16>
    %c0_36 = arith.constant 0 : index
    %c0_37 = arith.constant 0 : index
    %126 = vector.load %arg9[%c0_36, %c0_37] : memref<256x128xbf16, #tpu.memory_space<vmem>>, vector<256x128xbf16>
    %cst_38 = arith.constant dense<0.000000e+00> : vector<32x128xf32>
    %127 = tpu.matmul %125, %126, %cst_38 {dimension_numbers = #tpu.dot_dimension_numbers<[1], [0], [0], [1], [0, 0, 1, 1], [], []>} : vector<32x256xbf16>, vector<256x128xbf16>, vector<32x128xf32> -> vector<32x128xf32>
    %128 = vector.shape_cast %127 : vector<32x128xf32> to vector<2x16x128xf32>
    %c0_39 = arith.constant 0 : index
    %c0_40 = arith.constant 0 : index
    %129 = vector.load %arg10[%c0_39, %c0_40] : memref<1x128xf32, #tpu.memory_space<vmem>>, vector<1x128xf32>
    %130 = vector.shape_cast %129 : vector<1x128xf32> to vector<128xf32>
    %131 = vector.shape_cast %130 : vector<128xf32> to vector<1x1x128xf32>
    %132 = vector.broadcast %131 : vector<1x1x128xf32> to vector<2x16x128xf32>
    %133 = arith.addf %128, %132 : vector<2x16x128xf32>
    %134 = arith.addf %133, %89 : vector<2x16x128xf32>
    %c0_41 = arith.constant 0 : index
    %c0_42 = arith.constant 0 : index
    %c0_43 = arith.constant 0 : index
    %135 = vector.load %arg11[%c0_41, %c0_42, %c0_43] : memref<2x16x128xf32, #tpu.memory_space<vmem>>, vector<2x16x128xf32>
    tpu.vector_store %arg11[%c0_41, %c0_42, %c0_43], %134 {strides = array<i32>} : memref<2x16x128xf32, #tpu.memory_space<vmem>>, vector<2x16x128xf32>,
    %136 = vector.extract_strided_slice %86 {offsets = [0, 15, 0], sizes = [2, 1, 128], strides = [1, 1, 1]} : vector<2x16x128xf32> to vector<2x1x128xf32>
    %c0_44 = arith.constant 0 : index
    %c0_45 = arith.constant 0 : index
    %c0_46 = arith.constant 0 : index
    %137 = vector.load %arg12[%c0_44, %c0_45, %c0_46] : memref<2x1x128xf32, #tpu.memory_space<vmem>>, vector<2x1x128xf32>
    tpu.vector_store %arg12[%c0_44, %c0_45, %c0_46], %136 {strides = array<i32>} : memref<2x1x128xf32, #tpu.memory_space<vmem>>, vector<2x1x128xf32>,
    return
  }
  func.func @transform_0(%arg0: i32) -> (i32, i32, i32) {
    %c0_i32 = arith.constant 0 : i32
    %c0_i32_0 = arith.constant 0 : i32
    %c0_i32_1 = arith.constant 0 : i32
    return %arg0, %c0_i32, %c0_i32_0 : i32, i32, i32
  }
  func.func @transform_1(%arg0: i32) -> (i32, i32, i32) {
    %c0_i32 = arith.constant 0 : i32
    %c0_i32_0 = arith.constant 0 : i32
    %c0_i32_1 = arith.constant 0 : i32
    return %arg0, %c0_i32, %c0_i32_0 : i32, i32, i32
  }
  func.func @transform_2(%arg0: i32) -> (i32, i32) {
    %c0_i32 = arith.constant 0 : i32
    %c0_i32_0 = arith.constant 0 : i32
    %c0_i32_1 = arith.constant 0 : i32
    return %c0_i32, %c0_i32_0 : i32, i32
  }
  func.func @transform_3(%arg0: i32) -> (i32, i32) {
    %c0_i32 = arith.constant 0 : i32
    %c0_i32_0 = arith.constant 0 : i32
    %c0_i32_1 = arith.constant 0 : i32
    return %c0_i32, %c0_i32_0 : i32, i32
  }
  func.func @transform_4(%arg0: i32) -> (i32, i32) {
    %c0_i32 = arith.constant 0 : i32
    %c0_i32_0 = arith.constant 0 : i32
    %c0_i32_1 = arith.constant 0 : i32
    return %c0_i32, %c0_i32_0 : i32, i32
  }
  func.func @transform_5(%arg0: i32) -> (i32, i32) {
    %c0_i32 = arith.constant 0 : i32
    %c0_i32_0 = arith.constant 0 : i32
    %c0_i32_1 = arith.constant 0 : i32
    return %c0_i32, %c0_i32_0 : i32, i32
  }
  func.func @transform_6(%arg0: i32) -> (i32, i32) {
    %c0_i32 = arith.constant 0 : i32
    %c0_i32_0 = arith.constant 0 : i32
    %c0_i32_1 = arith.constant 0 : i32
    return %c0_i32, %c0_i32_0 : i32, i32
  }
  func.func @transform_7(%arg0: i32) -> (i32, i32) {
    %c0_i32 = arith.constant 0 : i32
    %c0_i32_0 = arith.constant 0 : i32
    %c0_i32_1 = arith.constant 0 : i32
    return %c0_i32, %c0_i32_0 : i32, i32
  }
  func.func @transform_8(%arg0: i32) -> (i32, i32) {
    %c0_i32 = arith.constant 0 : i32
    %c0_i32_0 = arith.constant 0 : i32
    %c0_i32_1 = arith.constant 0 : i32
    return %c0_i32, %c0_i32_0 : i32, i32
  }
  func.func @transform_9(%arg0: i32) -> (i32, i32) {
    %c0_i32 = arith.constant 0 : i32
    %c0_i32_0 = arith.constant 0 : i32
    %c0_i32_1 = arith.constant 0 : i32
    return %c0_i32, %c0_i32_0 : i32, i32
  }
  func.func @transform_10(%arg0: i32) -> (i32, i32, i32) {
    %c0_i32 = arith.constant 0 : i32
    %c0_i32_0 = arith.constant 0 : i32
    %c0_i32_1 = arith.constant 0 : i32
    return %arg0, %c0_i32, %c0_i32_0 : i32, i32, i32
  }
  func.func @transform_11(%arg0: i32) -> (i32, i32, i32) {
    %c0_i32 = arith.constant 0 : i32
    %c0_i32_0 = arith.constant 0 : i32
    %c0_i32_1 = arith.constant 0 : i32
    return %arg0, %c0_i32, %c0_i32_0 : i32, i32, i32
  }
}

</mosaic_0001>

<llo_original>
// kernel: qlstm_block_forward.1
$region0: #{qlstm_block_forward.1}
  #allocation0 [shape = 'u32[]', space=smem, size = 0x4, offset = 0x4, fixed_abs, tag = 'smem constant byte address 0x4 - core index']
  #allocation1 [shape = 'u32[144,128]{1,0:T(1,128)}', space=vmem, size = 0x12000, scoped, tag = 'internal scratch']
  %s0 = inlined_call_operand.vmem [shape: f32[4,16,128], index: 0, kind: input, shape index: {}]
  %s1 = inlined_call_operand.vmem [shape: f32[4,1,128], index: 1, kind: input, shape index: {}]
  %s2 = inlined_call_operand.vmem [shape: f32[1,128], index: 2, kind: input, shape index: {}]
  %s3 = inlined_call_operand.vmem [shape: bf16[128,512], index: 3, kind: input, shape index: {}]
  %s4 = inlined_call_operand.vmem [shape: f32[1,512], index: 4, kind: input, shape index: {}]
  %s5 = inlined_call_operand.vmem [shape: f32[1,128], index: 5, kind: input, shape index: {}]
  %s6 = inlined_call_operand.vmem [shape: bf16[128,512], index: 6, kind: input, shape index: {}]
  %s7 = inlined_call_operand.vmem [shape: f32[1,512], index: 7, kind: input, shape index: {}]
  %s8 = inlined_call_operand.vmem [shape: bf16[256,128], index: 8, kind: input, shape index: {}]
  %s9 = inlined_call_operand.vmem [shape: f32[1,128], index: 9, kind: input, shape index: {}]
  %s10 = inlined_call_operand.hbm [shape: f32[4,16,128], index: 10, kind: output, shape index: {0}]
  %s11 = inlined_call_operand.hbm [shape: f32[4,1,128], index: 11, kind: output, shape index: {1}]
  %12 = xla_tuple %s10, %s11
  %s13 = sld [smem:[#allocation0]]
  $region81: #{qlstm_block_forward.1} parent=0
    _
  %s15 = ssub.s32 1, %s13
  %s16 = scalar_select 0, %s15, %s13
  $region1: #{qlstm_block_forward.1} parent=0
    #allocation2 [shape = 'u8[32768]{0}', space=vmem, size = 0x8000, scoped, tag = 'output window, operand 0']
    #allocation3 [shape = 's32[2]{0}', space=sflag, size = 0x8, scoped, tag = 'scoped memory for qlstm_block_forward.1']
    #allocation4 [shape = 'u8[2048]{0}', space=vmem, size = 0x800, scoped, tag = 'output window, operand 1']
    #allocation5 [shape = 's32[2]{0}', space=sflag, size = 0x8, scoped, tag = 'scoped memory for qlstm_block_forward.1']
    %17 = vsyncpa [#allocation3], 0
    %s18 = scalar_lea.sflag [#allocation3], 1
    %19 = vsyncpa %s18, 0
    %20 = vsyncpa [#allocation5], 0
    %s21 = scalar_lea.sflag [#allocation5], 1
    %22 = vsyncpa %s21, 0
    loop: start=0, step=1, limit=4
    $region2: #{qlstm_block_forward.1} parent=1 // loop_pre_header
      _
    $region3: #{qlstm_block_forward.1} parent=1 // loop_header
      %s24 = sphi 0, %s28
      %p25 = scmp.ge.s32.totalorder %s24, 4
      %s34 = sphi 0, %s36
      %s37 = sphi 0, %s34
      %s38 = sphi 0, %s37
      %s54 = sphi 0, %s38
      %s60 = sphi 0, %s62
      %s63 = sphi 0, %s60
      %s64 = sphi 0, %s63
      %s80 = sphi 0, %s64
      %s84 = sphi 0, %s84
      %s86 = sphi 0, %s84
      %s87 = sphi 0, %s86
      %s101 = sphi 0, %s87
      %s105 = sphi 0, %s105
      %s107 = sphi 0, %s105
      %s108 = sphi 0, %s107
      %s122 = sphi 0, %s108
      %s126 = sphi 0, %s126
      %s128 = sphi 0, %s126
      %s129 = sphi 0, %s128
      %s143 = sphi 0, %s129
      %s147 = sphi 0, %s147
      %s149 = sphi 0, %s147
      %s150 = sphi 0, %s149
      %s164 = sphi 0, %s150
      %s168 = sphi 0, %s168
      %s170 = sphi 0, %s168
      %s171 = sphi 0, %s170
      %s185 = sphi 0, %s171
      %s189 = sphi 0, %s189
      %s191 = sphi 0, %s189
      %s192 = sphi 0, %s191
      %s206 = sphi 0, %s192
      %s210 = sphi 0, %s210
      %s212 = sphi 0, %s210
      %s213 = sphi 0, %s212
      %s227 = sphi 0, %s213
      %s231 = sphi 0, %s231
      %s233 = sphi 0, %s231
      %s234 = sphi 0, %s233
      %s248 = sphi 0, %s234
      %s254 = sphi 0, %s256
      %s257 = sphi 0, %s254
      %s258 = sphi 0, %s257
      %s274 = sphi 0, %s258
      %s280 = sphi 0, %s282
      %s283 = sphi 0, %s280
      %s284 = sphi 0, %s283
      %s300 = sphi 0, %s284
    $region4: #{qlstm_block_forward.1} parent=1 // loop_header_branch
      %27 = sbr.rel (%p25) target = $region8
    $region5: #{qlstm_block_forward.1} parent=1 // loop_body
      %s29 = ssub.s32 %s24, 1
      %s30 = ssub.s32 %s24, 2
      %s31 = sadd.s32 %s24, 1
      %s32 = ssub.s32 %s24, %s31
      %p33 = scmp.eq.s32.totalorder %s32, 0
      %s35 = sadd.s32 %s34, 1
      %s36 = scalar_select %p33, %s34, %s35
      %p39 = pneg %p33
      %p40 = scmp.eq.s32.totalorder %s24, 1
      %p41 = por %p39, %p40
      %p42 = scmp.ne.s32.totalorder %s34, %s37
      %p43 = scmp.eq.s32.totalorder %s24, 0
      %p44 = por %p42, %p43
      %p45 = scmp.ne.s32.totalorder %s34, %s37
      %p46 = scmp.eq.s32.totalorder %s29, 1
      %p47 = por %p45, %p46
      %p48 = scmp.ne.s32.totalorder %s37, %s38
      %p49 = scmp.eq.s32.totalorder %s29, 0
      %p50 = por %p48, %p49
      %p51 = scmp.ne.s32.totalorder %s37, %s38
      %p52 = scmp.eq.s32.totalorder %s30, 1
      %p53 = por %p51, %p52
      %p55 = scmp.ne.s32.totalorder %s38, %s54
      %p56 = scmp.eq.s32.totalorder %s30, 0
      %p57 = por %p55, %p56
      %s58 = ssub.s32 %s24, %s31
      %p59 = scmp.eq.s32.totalorder %s58, 0
      %s61 = sadd.s32 %s60, 1
      %s62 = scalar_select %p59, %s60, %s61
      %p65 = pneg %p59
      %p66 = scmp.eq.s32.totalorder %s24, 1
      %p67 = por %p65, %p66
      %p68 = scmp.ne.s32.totalorder %s60, %s63
      %p69 = scmp.eq.s32.totalorder %s24, 0
      %p70 = por %p68, %p69
      %p71 = scmp.ne.s32.totalorder %s60, %s63
      %p72 = scmp.eq.s32.totalorder %s29, 1
      %p73 = por %p71, %p72
      %p74 = scmp.ne.s32.totalorder %s63, %s64
      %p75 = scmp.eq.s32.totalorder %s29, 0
      %p76 = por %p74, %p75
      %p77 = scmp.ne.s32.totalorder %s63, %s64
      %p78 = scmp.eq.s32.totalorder %s30, 1
      %p79 = por %p77, %p78
      %p81 = scmp.ne.s32.totalorder %s64, %s80
      %p82 = scmp.eq.s32.totalorder %s30, 0
      %p83 = por %p81, %p82
      %s85 = sadd.s32 %s84, 1
      %p88 = scmp.eq.s32.totalorder %s24, 1
      %p89 = scmp.ne.s32.totalorder %s84, %s86
      %p90 = scmp.eq.s32.totalorder %s24, 0
      %p91 = por %p89, %p90
      %p92 = scmp.ne.s32.totalorder %s84, %s86
      %p93 = scmp.eq.s32.totalorder %s29, 1
      %p94 = por %p92, %p93
      %p95 = scmp.ne.s32.totalorder %s86, %s87
      %p96 = scmp.eq.s32.totalorder %s29, 0
      %p97 = por %p95, %p96
      %p98 = scmp.ne.s32.totalorder %s86, %s87
      %p99 = scmp.eq.s32.totalorder %s30, 1
      %p100 = por %p98, %p99
      %p102 = scmp.ne.s32.totalorder %s87, %s101
      %p103 = scmp.eq.s32.totalorder %s30, 0
      %p104 = por %p102, %p103
      %s106 = sadd.s32 %s105, 1
      %p109 = scmp.eq.s32.totalorder %s24, 1
      %p110 = scmp.ne.s32.totalorder %s105, %s107
      %p111 = scmp.eq.s32.totalorder %s24, 0
      %p112 = por %p110, %p111
      %p113 = scmp.ne.s32.totalorder %s105, %s107
      %p114 = scmp.eq.s32.totalorder %s29, 1
      %p115 = por %p113, %p114
      %p116 = scmp.ne.s32.totalorder %s107, %s108
      %p117 = scmp.eq.s32.totalorder %s29, 0
      %p118 = por %p116, %p117
      %p119 = scmp.ne.s32.totalorder %s107, %s108
      %p120 = scmp.eq.s32.totalorder %s30, 1
      %p121 = por %p119, %p120
      %p123 = scmp.ne.s32.totalorder %s108, %s122
      %p124 = scmp.eq.s32.totalorder %s30, 0
      %p125 = por %p123, %p124
      %s127 = sadd.s32 %s126, 1
      %p130 = scmp.eq.s32.totalorder %s24, 1
      %p131 = scmp.ne.s32.totalorder %s126, %s128
      %p132 = scmp.eq.s32.totalorder %s24, 0
      %p133 = por %p131, %p132
      %p134 = scmp.ne.s32.totalorder %s126, %s128
      %p135 = scmp.eq.s32.totalorder %s29, 1
      %p136 = por %p134, %p135
      %p137 = scmp.ne.s32.totalorder %s128, %s129
      %p138 = scmp.eq.s32.totalorder %s29, 0
      %p139 = por %p137, %p138
      %p140 = scmp.ne.s32.totalorder %s128, %s129
      %p141 = scmp.eq.s32.totalorder %s30, 1
      %p142 = por %p140, %p141
      %p144 = scmp.ne.s32.totalorder %s129, %s143
      %p145 = scmp.eq.s32.totalorder %s30, 0
      %p146 = por %p144, %p145
      %s148 = sadd.s32 %s147, 1
      %p151 = scmp.eq.s32.totalorder %s24, 1
      %p152 = scmp.ne.s32.totalorder %s147, %s149
      %p153 = scmp.eq.s32.totalorder %s24, 0
      %p154 = por %p152, %p153
      %p155 = scmp.ne.s32.totalorder %s147, %s149
      %p156 = scmp.eq.s32.totalorder %s29, 1
      %p157 = por %p155, %p156
      %p158 = scmp.ne.s32.totalorder %s149, %s150
      %p159 = scmp.eq.s32.totalorder %s29, 0
      %p160 = por %p158, %p159
      %p161 = scmp.ne.s32.totalorder %s149, %s150
      %p162 = scmp.eq.s32.totalorder %s30, 1
      %p163 = por %p161, %p162
      %p165 = scmp.ne.s32.totalorder %s150, %s164
      %p166 = scmp.eq.s32.totalorder %s30, 0
      %p167 = por %p165, %p166
      %s169 = sadd.s32 %s168, 1
      %p172 = scmp.eq.s32.totalorder %s24, 1
      %p173 = scmp.ne.s32.totalorder %s168, %s170
      %p174 = scmp.eq.s32.totalorder %s24, 0
      %p175 = por %p173, %p174
      %p176 = scmp.ne.s32.totalorder %s168, %s170
      %p177 = scmp.eq.s32.totalorder %s29, 1
      %p178 = por %p176, %p177
      %p179 = scmp.ne.s32.totalorder %s170, %s171
      %p180 = scmp.eq.s32.totalorder %s29, 0
      %p181 = por %p179, %p180
      %p182 = scmp.ne.s32.totalorder %s170, %s171
      %p183 = scmp.eq.s32.totalorder %s30, 1
      %p184 = por %p182, %p183
      %p186 = scmp.ne.s32.totalorder %s171, %s185
      %p187 = scmp.eq.s32.totalorder %s30, 0
      %p188 = por %p186, %p187
      %s190 = sadd.s32 %s189, 1
      %p193 = scmp.eq.s32.totalorder %s24, 1
      %p194 = scmp.ne.s32.totalorder %s189, %s191
      %p195 = scmp.eq.s32.totalorder %s24, 0
      %p196 = por %p194, %p195
      %p197 = scmp.ne.s32.totalorder %s189, %s191
      %p198 = scmp.eq.s32.totalorder %s29, 1
      %p199 = por %p197, %p198
      %p200 = scmp.ne.s32.totalorder %s191, %s192
      %p201 = scmp.eq.s32.totalorder %s29, 0
      %p202 = por %p200, %p201
      %p203 = scmp.ne.s32.totalorder %s191, %s192
      %p204 = scmp.eq.s32.totalorder %s30, 1
      %p205 = por %p203, %p204
      %p207 = scmp.ne.s32.totalorder %s192, %s206
      %p208 = scmp.eq.s32.totalorder %s30, 0
      %p209 = por %p207, %p208
      %s211 = sadd.s32 %s210, 1
      %p214 = scmp.eq.s32.totalorder %s24, 1
      %p215 = scmp.ne.s32.totalorder %s210, %s212
      %p216 = scmp.eq.s32.totalorder %s24, 0
      %p217 = por %p215, %p216
      %p218 = scmp.ne.s32.totalorder %s210, %s212
      %p219 = scmp.eq.s32.totalorder %s29, 1
      %p220 = por %p218, %p219
      %p221 = scmp.ne.s32.totalorder %s212, %s213
      %p222 = scmp.eq.s32.totalorder %s29, 0
      %p223 = por %p221, %p222
      %p224 = scmp.ne.s32.totalorder %s212, %s213
      %p225 = scmp.eq.s32.totalorder %s30, 1
      %p226 = por %p224, %p225
      %p228 = scmp.ne.s32.totalorder %s213, %s227
      %p229 = scmp.eq.s32.totalorder %s30, 0
      %p230 = por %p228, %p229
      %s232 = sadd.s32 %s231, 1
      %p235 = scmp.eq.s32.totalorder %s24, 1
      %p236 = scmp.ne.s32.totalorder %s231, %s233
      %p237 = scmp.eq.s32.totalorder %s24, 0
      %p238 = por %p236, %p237
      %p239 = scmp.ne.s32.totalorder %s231, %s233
      %p240 = scmp.eq.s32.totalorder %s29, 1
      %p241 = por %p239, %p240
      %p242 = scmp.ne.s32.totalorder %s233, %s234
      %p243 = scmp.eq.s32.totalorder %s29, 0
      %p244 = por %p242, %p243
      %p245 = scmp.ne.s32.totalorder %s233, %s234
      %p246 = scmp.eq.s32.totalorder %s30, 1
      %p247 = por %p245, %p246
      %p249 = scmp.ne.s32.totalorder %s234, %s248
      %p250 = scmp.eq.s32.totalorder %s30, 0
      %p251 = por %p249, %p250
      %s252 = ssub.s32 %s24, %s31
      %p253 = scmp.eq.s32.totalorder %s252, 0
      %s255 = sadd.s32 %s254, 1
      %s256 = scalar_select %p253, %s254, %s255
      %p259 = pneg %p253
      %p260 = scmp.eq.s32.totalorder %s24, 1
      %p261 = por %p259, %p260
      %p262 = scmp.ne.s32.totalorder %s254, %s257
      %p263 = scmp.eq.s32.totalorder %s24, 0
      %p264 = por %p262, %p263
      %p265 = scmp.ne.s32.totalorder %s254, %s257
      %p266 = scmp.eq.s32.totalorder %s29, 1
      %p267 = por %p265, %p266
      %p268 = scmp.ne.s32.totalorder %s257, %s258
      %p269 = scmp.eq.s32.totalorder %s29, 0
      %p270 = por %p268, %p269
      %p271 = scmp.ne.s32.totalorder %s257, %s258
      %p272 = scmp.eq.s32.totalorder %s30, 1
      %p273 = por %p271, %p272
      %p275 = scmp.ne.s32.totalorder %s258, %s274
      %p276 = scmp.eq.s32.totalorder %s30, 0
      %p277 = por %p275, %p276
      %s278 = ssub.s32 %s24, %s31
      %p279 = scmp.eq.s32.totalorder %s278, 0
      %s281 = sadd.s32 %s280, 1
      %s282 = scalar_select %p279, %s280, %s281
      %p285 = pneg %p279
      %p286 = scmp.eq.s32.totalorder %s24, 1
      %p287 = por %p285, %p286
      %p288 = scmp.ne.s32.totalorder %s280, %s283
      %p289 = scmp.eq.s32.totalorder %s24, 0
      %p290 = por %p288, %p289
      %p291 = scmp.ne.s32.totalorder %s280, %s283
      %p292 = scmp.eq.s32.totalorder %s29, 1
      %p293 = por %p291, %p292
      %p294 = scmp.ne.s32.totalorder %s283, %s284
      %p295 = scmp.eq.s32.totalorder %s29, 0
      %p296 = por %p294, %p295
      %p297 = scmp.ne.s32.totalorder %s283, %s284
      %p298 = scmp.eq.s32.totalorder %s30, 1
      %p299 = por %p297, %p298
      %p301 = scmp.ne.s32.totalorder %s284, %s300
      %p302 = scmp.eq.s32.totalorder %s30, 0
      %p303 = por %p301, %p302
      %p304 = scmp.le.s32.totalorder 1, %s24
      %p305 = scmp.lt.s32.totalorder %s24, 3
      %p306 = pnand %p304, %p305
      %p307 = pneg %p306
      // Predicated region
      $region9: #{qlstm_block_forward.1} parent=5 // pred_check
        _
      $region10: #{qlstm_block_forward.1} parent=5 // pred_check_branch
        %309 = sbr.rel (%p306) target = $region12
      $region11: #{qlstm_block_forward.1} parent=5 // pred_region
        %s310 = ssub.s32 %s24, 1
        // Predicated region
        $region13: #{qlstm_block_forward.1} parent=11 // pred_check
          %p311 = pneg %p97
        $region14: #{qlstm_block_forward.1} parent=11 // pred_check_branch
          %313 = sbr.rel (%p311) target = $region16
        $region15: #{qlstm_block_forward.1} parent=11 // pred_region
          _
        $region16: #{qlstm_block_forward.1} parent=11 // pred_fallthru
          _
        // Predicated region
        $region17: #{qlstm_block_forward.1} parent=11 // pred_check
          %p314 = pneg %p118
        $region18: #{qlstm_block_forward.1} parent=11 // pred_check_branch
          %316 = sbr.rel (%p314) target = $region20
        $region19: #{qlstm_block_forward.1} parent=11 // pred_region
          _
        $region20: #{qlstm_block_forward.1} parent=11 // pred_fallthru
          _
        // Predicated region
        $region21: #{qlstm_block_forward.1} parent=11 // pred_check
          %p317 = pneg %p139
        $region22: #{qlstm_block_forward.1} parent=11 // pred_check_branch
          %319 = sbr.rel (%p317) target = $region24
        $region23: #{qlstm_block_forward.1} parent=11 // pred_region
          _
        $region24: #{qlstm_block_forward.1} parent=11 // pred_fallthru
          _
        // Predicated region
        $region25: #{qlstm_block_forward.1} parent=11 // pred_check
          %p320 = pneg %p160
        $region26: #{qlstm_block_forward.1} parent=11 // pred_check_branch
          %322 = sbr.rel (%p320) target = $region28
        $region27: #{qlstm_block_forward.1} parent=11 // pred_region
          _
        $region28: #{qlstm_block_forward.1} parent=11 // pred_fallthru
          _
        // Predicated region
        $region29: #{qlstm_block_forward.1} parent=11 // pred_check
          %p323 = pneg %p181
        $region30: #{qlstm_block_forward.1} parent=11 // pred_check_branch
          %325 = sbr.rel (%p323) target = $region32
        $region31: #{qlstm_block_forward.1} parent=11 // pred_region
          _
        $region32: #{qlstm_block_forward.1} parent=11 // pred_fallthru
          _
        // Predicated region
        $region33: #{qlstm_block_forward.1} parent=11 // pred_check
          %p326 = pneg %p202
        $region34: #{qlstm_block_forward.1} parent=11 // pred_check_branch
          %328 = sbr.rel (%p326) target = $region36
        $region35: #{qlstm_block_forward.1} parent=11 // pred_region
          _
        $region36: #{qlstm_block_forward.1} parent=11 // pred_fallthru
          _
        // Predicated region
        $region37: #{qlstm_block_forward.1} parent=11 // pred_check
          %p329 = pneg %p223
        $region38: #{qlstm_block_forward.1} parent=11 // pred_check_branch
          %331 = sbr.rel (%p329) target = $region40
        $region39: #{qlstm_block_forward.1} parent=11 // pred_region
          _
        $region40: #{qlstm_block_forward.1} parent=11 // pred_fallthru
          _
        // Predicated region
        $region41: #{qlstm_block_forward.1} parent=11 // pred_check
          %p332 = pneg %p244
        $region42: #{qlstm_block_forward.1} parent=11 // pred_check_branch
          %334 = sbr.rel (%p332) target = $region44
        $region43: #{qlstm_block_forward.1} parent=11 // pred_region
          _
        $region44: #{qlstm_block_forward.1} parent=11 // pred_fallthru
          _
      $region12: #{qlstm_block_forward.1} parent=5 // pred_fallthru
        _
      %p335 = scmp.lt.s32.totalorder %s24, 2
      // Predicated region
      $region45: #{qlstm_block_forward.1} parent=5 // pred_check
        %p336 = pneg %p335
      $region46: #{qlstm_block_forward.1} parent=5 // pred_check_branch
        %338 = sbr.rel (%p336) target = $region48
      $region47: #{qlstm_block_forward.1} parent=5 // pred_region
        // Predicated region
        $region49: #{qlstm_block_forward.1} parent=47 // pred_check
          %p339 = pneg %p44
        $region50: #{qlstm_block_forward.1} parent=47 // pred_check_branch
          %341 = sbr.rel (%p339) target = $region52
        $region51: #{qlstm_block_forward.1} parent=47 // pred_region
          %s342 = smul.u32 2, %s24
          %p343 = scmp.lt.s32.totalorder %s342, 3
          %s344 = scalar_select %p343, %s342, 3
          %s345 = smul.addr %s344, 2
          %s346 = smul.addr %s345, 8
          %s347 = scalar_lea.vmem %s0, %s346
          %s348 = smul.u32 2, %s24
        $region52: #{qlstm_block_forward.1} parent=47 // pred_fallthru
          _
        // Predicated region
        $region53: #{qlstm_block_forward.1} parent=47 // pred_check
          %p349 = pneg %p70
        $region54: #{qlstm_block_forward.1} parent=47 // pred_check_branch
          %351 = sbr.rel (%p349) target = $region56
        $region55: #{qlstm_block_forward.1} parent=47 // pred_region
          %s352 = smul.u32 2, %s24
          %p353 = scmp.lt.s32.totalorder %s352, 3
          %s354 = scalar_select %p353, %s352, 3
          %s355 = scalar_lea.vmem %s1, %s354
          %s356 = smul.u32 2, %s24
        $region56: #{qlstm_block_forward.1} parent=47 // pred_fallthru
          _
      $region48: #{qlstm_block_forward.1} parent=5 // pred_fallthru
        _
      %p357 = scmp.le.s32.totalorder 1, %s24
      %p358 = scmp.lt.s32.totalorder %s24, 3
      %p359 = pnand %p357, %p358
      %p360 = pneg %p359
      // Predicated region
      $region57: #{qlstm_block_forward.1} parent=5 // pred_check
        _
      $region58: #{qlstm_block_forward.1} parent=5 // pred_check_branch
        %362 = sbr.rel (%p359) target = $region60
      $region59: #{qlstm_block_forward.1} parent=5 // pred_region
        %s363 = ssub.s32 %s24, 1
        %s364 = smul.u32 2, %s29
        %p365 = scmp.lt.s32.totalorder %s364, 3
        %s366 = scalar_select %p365, %s364, 3
        %s367 = smul.addr %s366, 2
        %s368 = smul.addr %s367, 8
        %s369 = scalar_lea.vmem %s0, %s368
        %p370 = pneg %p50
        %p371 = pneg %p47
        %s372 = smul.u32 2, %s29
        %p373 = scmp.lt.s32.totalorder %s372, 3
        %s374 = scalar_select %p373, %s372, 3
        %s375 = scalar_lea.vmem %s1, %s374
        %p376 = pneg %p76
        %p377 = pneg %p73
        %p378 = pneg %p97
        %p379 = pneg %p94
        %p380 = pneg %p118
        %p381 = pneg %p115
        %p382 = pneg %p139
        %p383 = pneg %p136
        %p384 = pneg %p160
        %p385 = pneg %p157
        %p386 = pneg %p181
        %p387 = pneg %p178
        %p388 = pneg %p202
        %p389 = pneg %p199
        %p390 = pneg %p223
        %p391 = pneg %p220
        %p392 = pneg %p244
        %p393 = pneg %p241
        %p394 = pneg %p270
        %p395 = pneg %p267
        %s396 = sand.u32 %s257, 1
        %s397 = scalar_lea.sflag [#allocation3], %s396
        %s398 = sand.u32 %s257, 1
        %s399 = smul.addr %s398, 32
        %s400 = scalar_lea.vmem [#allocation2], %s399
        %p401 = pneg %p296
        %p402 = pneg %p293
        %s403 = sand.u32 %s283, 1
        %s404 = scalar_lea.sflag [#allocation5], %s403
        %s405 = sand.u32 %s283, 1
        %s406 = smul.addr %s405, 2
        %s407 = scalar_lea.vmem [#allocation4], %s406
        %s408 = smul.u32 2, %s29
        %p409 = scmp.lt.s32.totalorder %s408, 3
        %s410 = scalar_select %p409, %s408, 3
        %s411 = smul.addr %s410, 2
        %s412 = smul.addr %s411, 8
        %s413 = scalar_lea.vmem %s0, %s412
        %s414 = smul.u32 2, %s29
        %s415 = smul.u32 2, %s29
        %p416 = scmp.lt.s32.totalorder %s415, 3
        %s417 = scalar_select %p416, %s415, 3
        %s418 = scalar_lea.vmem %s1, %s417
        %s419 = smul.u32 2, %s29
        %s420 = smul.u32 2, %s29
        %s421 = smul.u32 2, %s29
        %v423 = vld [vmem:[%s413] sm:$0xff]
        %v424 = vld [vmem:[%s413 + $0x8] sm:$0xff]
        %v425 = vld [vmem:[%s413 + $0x10] sm:$0xff]
        %v426 = vld [vmem:[%s413 + $0x18] sm:$0xff]
        %v427 = vld [vmem:[%s2] sm:$0x1]
        %v428 = vmul.f32 %v423, %v423
        %v429 = vmul.f32 %v424, %v424
        %v430 = vmul.f32 %v425, %v425
        %v431 = vmul.f32 %v426, %v426
        %432 = vadd.xlane.f32.xlu0 %v428
        %v433 = vpop.xlane.xlu0 %432
        %434 = vadd.xlane.f32.xlu0 %v429
        %v435 = vpop.xlane.xlu0 %434
        %436 = vadd.xlane.f32.xlu0 %v430
        %v437 = vpop.xlane.xlu0 %436
        %438 = vadd.xlane.f32.xlu0 %v431
        %v439 = vpop.xlane.xlu0 %438
        %v440 = vrcp.pop 128.0
        %v441 = vmul.f32 %v433, %v440
        %v442 = vmul.f32 %v435, %v440
        %v443 = vmul.f32 %v437, %v440
        %v444 = vmul.f32 %v439, %v440
        %v445 = vadd.f32 %v441, 1e-06
        %v446 = vadd.f32 %v442, 1e-06
        %v447 = vadd.f32 %v443, 1e-06
        %v448 = vadd.f32 %v444, 1e-06
        %v449 = vrsqrt.pop %v445
        %v450 = vrsqrt.pop %v446
        %v451 = vrsqrt.pop %v447
        %v452 = vrsqrt.pop %v448
        %v453 = vmul.f32 %v423, %v449
        %v454 = vmul.f32 %v424, %v450
        %v455 = vmul.f32 %v425, %v451
        %v456 = vmul.f32 %v426, %v452
        %v458 = vlaneseq
        %v459 = vshrl.u32 %v458, 7
        %v460 = vsub.s32 0, %v459
        %v461 = vrot.slane %v427, %v460
        %v463 = vmul.f32 %v453, %v461
        %v464 = vmul.f32 %v454, %v461
        %v465 = vmul.f32 %v455, %v461
        %v466 = vmul.f32 %v456, %v461
        %v467 = vpack.c.bf16 %v464, %v463
        %v468 = vpack.c.bf16 %v466, %v465
        %v469 = vld [vmem:[%s3] sm:$0xff]
        %v470 = vld [vmem:[%s3 + $0x8] sm:$0xff]
        %v471 = vld [vmem:[%s3 + $0x10] sm:$0xff]
        %v472 = vld [vmem:[%s3 + $0x18] sm:$0xff]
        %v473 = vld [vmem:[%s3 + $0x20] sm:$0xff]
        %v474 = vld [vmem:[%s3 + $0x28] sm:$0xff]
        %v475 = vld [vmem:[%s3 + $0x30] sm:$0xff]
        %v476 = vld [vmem:[%s3 + $0x38] sm:$0xff]
        %v477 = vld [vmem:[%s3 + $0x40] sm:$0xff]
        %v478 = vld [vmem:[%s3 + $0x48] sm:$0xff]
        %v479 = vld [vmem:[%s3 + $0x50] sm:$0xff]
        %v480 = vld [vmem:[%s3 + $0x58] sm:$0xff]
        %v481 = vld [vmem:[%s3 + $0x60] sm:$0xff]
        %v482 = vld [vmem:[%s3 + $0x68] sm:$0xff]
        %v483 = vld [vmem:[%s3 + $0x70] sm:$0xff]
        %v484 = vld [vmem:[%s3 + $0x78] sm:$0xff]
        %v485 = vld [vmem:[%s3 + $0x80] sm:$0xff]
        %v486 = vld [vmem:[%s3 + $0x88] sm:$0xff]
        %v487 = vld [vmem:[%s3 + $0x90] sm:$0xff]
        %v488 = vld [vmem:[%s3 + $0x98] sm:$0xff]
        %v489 = vld [vmem:[%s3 + $0xa0] sm:$0xff]
        %v490 = vld [vmem:[%s3 + $0xa8] sm:$0xff]
        %v491 = vld [vmem:[%s3 + $0xb0] sm:$0xff]
        %v492 = vld [vmem:[%s3 + $0xb8] sm:$0xff]
        %v493 = vld [vmem:[%s3 + $0xc0] sm:$0xff]
        %v494 = vld [vmem:[%s3 + $0xc8] sm:$0xff]
        %v495 = vld [vmem:[%s3 + $0xd0] sm:$0xff]
        %v496 = vld [vmem:[%s3 + $0xd8] sm:$0xff]
        %v497 = vld [vmem:[%s3 + $0xe0] sm:$0xff]
        %v498 = vld [vmem:[%s3 + $0xe8] sm:$0xff]
        %v499 = vld [vmem:[%s3 + $0xf0] sm:$0xff]
        %v500 = vld [vmem:[%s3 + $0xf8] sm:$0xff]
        %v533 = vunpack.c.l.b16 %v469
        %v534 = vunpack.c.h.b16 %v469
        %v535 = vunpack.c.l.b16 %v470
        %v536 = vunpack.c.h.b16 %v470
        %v537 = vunpack.c.l.b16 %v471
        %v538 = vunpack.c.h.b16 %v471
        %v539 = vunpack.c.l.b16 %v472
        %v540 = vunpack.c.h.b16 %v472
        %v541 = vunpack.c.l.b16 %v473
        %v542 = vunpack.c.h.b16 %v473
        %v543 = vunpack.c.l.b16 %v474
        %v544 = vunpack.c.h.b16 %v474
        %v545 = vunpack.c.l.b16 %v475
        %v546 = vunpack.c.h.b16 %v475
        %v547 = vunpack.c.l.b16 %v476
        %v548 = vunpack.c.h.b16 %v476
        %v549 = vunpack.c.l.b16 %v477
        %v550 = vunpack.c.h.b16 %v477
        %v551 = vunpack.c.l.b16 %v478
        %v552 = vunpack.c.h.b16 %v478
        %v553 = vunpack.c.l.b16 %v479
        %v554 = vunpack.c.h.b16 %v479
        %v555 = vunpack.c.l.b16 %v480
        %v556 = vunpack.c.h.b16 %v480
        %v557 = vunpack.c.l.b16 %v481
        %v558 = vunpack.c.h.b16 %v481
        %v559 = vunpack.c.l.b16 %v482
        %v560 = vunpack.c.h.b16 %v482
        %v561 = vunpack.c.l.b16 %v483
        %v562 = vunpack.c.h.b16 %v483
        %v563 = vunpack.c.l.b16 %v484
        %v564 = vunpack.c.h.b16 %v484
        %v565 = vunpack.c.l.b16 %v485
        %v566 = vunpack.c.h.b16 %v485
        %v567 = vunpack.c.l.b16 %v486
        %v568 = vunpack.c.h.b16 %v486
        %v569 = vunpack.c.l.b16 %v487
        %v570 = vunpack.c.h.b16 %v487
        %v571 = vunpack.c.l.b16 %v488
        %v572 = vunpack.c.h.b16 %v488
        %v573 = vunpack.c.l.b16 %v489
        %v574 = vunpack.c.h.b16 %v489
        %v575 = vunpack.c.l.b16 %v490
        %v576 = vunpack.c.h.b16 %v490
        %v577 = vunpack.c.l.b16 %v491
        %v578 = vunpack.c.h.b16 %v491
        %v579 = vunpack.c.l.b16 %v492
        %v580 = vunpack.c.h.b16 %v492
        %v581 = vunpack.c.l.b16 %v493
        %v582 = vunpack.c.h.b16 %v493
        %v583 = vunpack.c.l.b16 %v494
        %v584 = vunpack.c.h.b16 %v494
        %v585 = vunpack.c.l.b16 %v495
        %v586 = vunpack.c.h.b16 %v495
        %v587 = vunpack.c.l.b16 %v496
        %v588 = vunpack.c.h.b16 %v496
        %v589 = vunpack.c.l.b16 %v497
        %v590 = vunpack.c.h.b16 %v497
        %v591 = vunpack.c.l.b16 %v498
        %v592 = vunpack.c.h.b16 %v498
        %v593 = vunpack.c.l.b16 %v499
        %v594 = vunpack.c.h.b16 %v499
        %v595 = vunpack.c.l.b16 %v500
        %v596 = vunpack.c.h.b16 %v500
        %v597 = vpack.c.b16 %v537, %v533
        %v598 = vpack.c.b16 %v538, %v534
        %v599 = vpack.c.b16 %v539, %v535
        %v600 = vpack.c.b16 %v540, %v536
        %v601 = vpack.c.b16 %v545, %v541
        %v602 = vpack.c.b16 %v546, %v542
        %v603 = vpack.c.b16 %v547, %v543
        %v604 = vpack.c.b16 %v548, %v544
        %v605 = vpack.c.b16 %v553, %v549
        %v606 = vpack.c.b16 %v554, %v550
        %v607 = vpack.c.b16 %v555, %v551
        %v608 = vpack.c.b16 %v556, %v552
        %v609 = vpack.c.b16 %v561, %v557
        %v610 = vpack.c.b16 %v562, %v558
        %v611 = vpack.c.b16 %v563, %v559
        %v612 = vpack.c.b16 %v564, %v560
        %v613 = vpack.c.b16 %v569, %v565
        %v614 = vpack.c.b16 %v570, %v566
        %v615 = vpack.c.b16 %v571, %v567
        %v616 = vpack.c.b16 %v572, %v568
        %v617 = vpack.c.b16 %v577, %v573
        %v618 = vpack.c.b16 %v578, %v574
        %v619 = vpack.c.b16 %v579, %v575
        %v620 = vpack.c.b16 %v580, %v576
        %v621 = vpack.c.b16 %v585, %v581
        %v622 = vpack.c.b16 %v586, %v582
        %v623 = vpack.c.b16 %v587, %v583
        %v624 = vpack.c.b16 %v588, %v584
        %v625 = vpack.c.b16 %v593, %v589
        %v626 = vpack.c.b16 %v594, %v590
        %v627 = vpack.c.b16 %v595, %v591
        %v628 = vpack.c.b16 %v596, %v592
        %661 = vmatprep.subr.bf16.mxu0 %v626
        %662 = vmatpush1.bf16.msra.mxu0 %v625
        %663 = vmatprep.subr.bf16.mxu0 %v622
        %664 = vmatpush1.bf16.msra.mxu0 %v621
        %665 = vmatprep.subr.bf16.mxu0 %v618
        %666 = vmatpush1.bf16.msra.mxu0 %v617
        %667 = vmatprep.subr.bf16.mxu0 %v614
        %668 = vmatpush1.bf16.msra.mxu0 %v613
        %669 = vmatprep.subr.bf16.mxu0 %v610
        %670 = vmatpush1.bf16.msra.mxu0 %v609
        %671 = vmatprep.subr.bf16.mxu0 %v606
        %672 = vmatpush1.bf16.msra.mxu0 %v605
        %673 = vmatprep.subr.bf16.mxu0 %v602
        %674 = vmatpush1.bf16.msra.mxu0 %v601
        %675 = vmatprep.subr.bf16.mxu0 %v598
        %676 = vmatpush1.bf16.msra.mxu0 %v597
        %677 = vmatprep.subr.bf16.mxu0 0
        %678 = vmatpush2.bf16.msra.mxu0 0
        %679 = vmatprep.subr.bf16.mxu0 0
        %680 = vmatpush2.bf16.msra.mxu0 0
        %681 = vmatprep.subr.bf16.mxu0 0
        %682 = vmatpush2.bf16.msra.mxu0 0
        %683 = vmatprep.subr.bf16.mxu0 0
        %684 = vmatpush2.bf16.msra.mxu0 0
        %685 = vmatprep.subr.bf16.mxu0 0
        %686 = vmatpush2.bf16.msra.mxu0 0
        %687 = vmatprep.subr.bf16.mxu0 0
        %688 = vmatpush2.bf16.msra.mxu0 0
        %689 = vmatprep.subr.bf16.mxu0 0
        %690 = vmatpush2.bf16.msra.mxu0 0
        %691 = vmatprep.subr.bf16.mxu0 0
        %692 = vmatpush2.bf16.msra.mxu0 0
        %693 = vmatprep.mubr.bf16.mxu0 0
        %694 = vmatmul.mubr.bf16.gmra.mxu0 %v467
        %v695 = vpop.f32.mrf.mxu0
        %v696 = vadd.f32 0.0, %v695
        %v697 = vpop.f32.mrf.mxu0
        %v698 = vadd.f32 0.0, %v697
        %v699 = vpop.f32.mrf.mxu0
        %v700 = vadd.f32 0.0, %v699
        %v701 = vpop.f32.mrf.mxu0
        %v702 = vadd.f32 0.0, %v701
        %703 = vmatprep.mubr.bf16.mxu0 0
        %704 = vmatmul.mubr.bf16.gmra.mxu0 %v468
        %v705 = vpop.f32.mrf.mxu0
        %v706 = vadd.f32 0.0, %v705
        %v707 = vpop.f32.mrf.mxu0
        %v708 = vadd.f32 0.0, %v707
        %v709 = vpop.f32.mrf.mxu0
        %v710 = vadd.f32 0.0, %v709
        %v711 = vpop.f32.mrf.mxu0
        %v712 = vadd.f32 0.0, %v711
        %713 = vdwg.mxu0
        %714 = vmatprep.subr.bf16.mxu0 %v628
        %715 = vmatpush1.bf16.msra.mxu0 %v627
        %716 = vmatprep.subr.bf16.mxu0 %v624
        %717 = vmatpush1.bf16.msra.mxu0 %v623
        %718 = vmatprep.subr.bf16.mxu0 %v620
        %719 = vmatpush1.bf16.msra.mxu0 %v619
        %720 = vmatprep.subr.bf16.mxu0 %v616
        %721 = vmatpush1.bf16.msra.mxu0 %v615
        %722 = vmatprep.subr.bf16.mxu0 %v612
        %723 = vmatpush1.bf16.msra.mxu0 %v611
        %724 = vmatprep.subr.bf16.mxu0 %v608
        %725 = vmatpush1.bf16.msra.mxu0 %v607
        %726 = vmatprep.subr.bf16.mxu0 %v604
        %727 = vmatpush1.bf16.msra.mxu0 %v603
        %728 = vmatprep.subr.bf16.mxu0 %v600
        %729 = vmatpush1.bf16.msra.mxu0 %v599
        %730 = vmatprep.subr.bf16.mxu0 0
        %731 = vmatpush2.bf16.msra.mxu0 0
        %732 = vmatprep.subr.bf16.mxu0 0
        %733 = vmatpush2.bf16.msra.mxu0 0
        %734 = vmatprep.subr.bf16.mxu0 0
        %735 = vmatpush2.bf16.msra.mxu0 0
        %736 = vmatprep.subr.bf16.mxu0 0
        %737 = vmatpush2.bf16.msra.mxu0 0
        %738 = vmatprep.subr.bf16.mxu0 0
        %739 = vmatpush2.bf16.msra.mxu0 0
        %740 = vmatprep.subr.bf16.mxu0 0
        %741 = vmatpush2.bf16.msra.mxu0 0
        %742 = vmatprep.subr.bf16.mxu0 0
        %743 = vmatpush2.bf16.msra.mxu0 0
        %744 = vmatprep.subr.bf16.mxu0 0
        %745 = vmatpush2.bf16.msra.mxu0 0
        %746 = vmatprep.mubr.bf16.mxu0 0
        %747 = vmatmul.mubr.bf16.gmra.mxu0 %v467
        %v748 = vpop.f32.mrf.mxu0
        %v749 = vadd.f32 0.0, %v748
        %v750 = vpop.f32.mrf.mxu0
        %v751 = vadd.f32 0.0, %v750
        %v752 = vpop.f32.mrf.mxu0
        %v753 = vadd.f32 0.0, %v752
        %v754 = vpop.f32.mrf.mxu0
        %v755 = vadd.f32 0.0, %v754
        %756 = vmatprep.mubr.bf16.mxu0 0
        %757 = vmatmul.mubr.bf16.gmra.mxu0 %v468
        %v758 = vpop.f32.mrf.mxu0
        %v759 = vadd.f32 0.0, %v758
        %v760 = vpop.f32.mrf.mxu0
        %v761 = vadd.f32 0.0, %v760
        %v762 = vpop.f32.mrf.mxu0
        %v763 = vadd.f32 0.0, %v762
        %v764 = vpop.f32.mrf.mxu0
        %v765 = vadd.f32 0.0, %v764
        %766 = vdwg.mxu0
        %v767 = vld [vmem:[%s4] sm:$0xf]
        %v769 = vlaneseq
        %v770 = vshrl.u32 %v769, 7
        %v771 = vsub.s32 0, %v770
        %v772 = vrot.slane %v767, %v771
        %v773 = vlaneseq
        %v774 = vshrl.u32 %v773, 7
        %v775 = vsub.s32 1, %v774
        %v776 = vrot.slane %v767, %v775
        %v777 = vlaneseq
        %v778 = vshrl.u32 %v777, 7
        %v779 = vsub.s32 2, %v778
        %v780 = vrot.slane %v767, %v779
        %v781 = vlaneseq
        %v782 = vshrl.u32 %v781, 7
        %v783 = vsub.s32 3, %v782
        %v784 = vrot.slane %v767, %v783
        %v789 = vadd.f32 %v696, %v772
        %v790 = vadd.f32 %v698, %v776
        %v791 = vadd.f32 %v749, %v780
        %v792 = vadd.f32 %v751, %v784
        %v793 = vadd.f32 %v700, %v772
        %v794 = vadd.f32 %v702, %v776
        %v795 = vadd.f32 %v753, %v780
        %v796 = vadd.f32 %v755, %v784
        %v797 = vadd.f32 %v706, %v772
        %v798 = vadd.f32 %v708, %v776
        %v799 = vadd.f32 %v759, %v780
        %v800 = vadd.f32 %v761, %v784
        %v801 = vadd.f32 %v710, %v772
        %v802 = vadd.f32 %v712, %v776
        %v803 = vadd.f32 %v763, %v780
        %v804 = vadd.f32 %v765, %v784
        %v805 = vxor.u32 %v789, 2147483648
        %v806 = vxor.u32 %v793, 2147483648
        %v807 = vxor.u32 %v797, 2147483648
        %v808 = vxor.u32 %v801, 2147483648
        %v809 = vmul.f32 %v805, 1.442695
        %v810 = vpow.pop %v809
        %v811 = vmul.f32 %v806, 1.442695
        %v812 = vpow.pop %v811
        %v813 = vmul.f32 %v807, 1.442695
        %v814 = vpow.pop %v813
        %v815 = vmul.f32 %v808, 1.442695
        %v816 = vpow.pop %v815
        %v817 = vadd.f32 %v810, 1.0
        %v818 = vadd.f32 %v812, 1.0
        %v819 = vadd.f32 %v814, 1.0
        %v820 = vadd.f32 %v816, 1.0
        %v821 = vrcp.pop %v817
        %v822 = vmul.f32 1.0, %v821
        %v823 = vrcp.pop %v818
        %v824 = vmul.f32 1.0, %v823
        %v825 = vrcp.pop %v819
        %v826 = vmul.f32 1.0, %v825
        %v827 = vrcp.pop %v820
        %v828 = vmul.f32 1.0, %v827
        %v829 = vtanh.pop %v790
        %v830 = vtanh.pop %v794
        %v831 = vtanh.pop %v798
        %v832 = vtanh.pop %v802
        %v833 = vxor.u32 %v791, 2147483648
        %v834 = vxor.u32 %v795, 2147483648
        %v835 = vxor.u32 %v799, 2147483648
        %v836 = vxor.u32 %v803, 2147483648
        %v837 = vmul.f32 %v833, 1.442695
        %v838 = vpow.pop %v837
        %v839 = vmul.f32 %v834, 1.442695
        %v840 = vpow.pop %v839
        %v841 = vmul.f32 %v835, 1.442695
        %v842 = vpow.pop %v841
        %v843 = vmul.f32 %v836, 1.442695
        %v844 = vpow.pop %v843
        %v845 = vadd.f32 %v838, 1.0
        %v846 = vadd.f32 %v840, 1.0
        %v847 = vadd.f32 %v842, 1.0
        %v848 = vadd.f32 %v844, 1.0
        %v849 = vrcp.pop %v845
        %v850 = vmul.f32 1.0, %v849
        %v851 = vrcp.pop %v846
        %v852 = vmul.f32 1.0, %v851
        %v853 = vrcp.pop %v847
        %v854 = vmul.f32 1.0, %v853
        %v855 = vrcp.pop %v848
        %v856 = vmul.f32 1.0, %v855
        %v857 = vmul.f32 %v829, %v850
        %v858 = vmul.f32 %v830, %v852
        %v859 = vmul.f32 %v831, %v854
        %v860 = vmul.f32 %v832, %v856
        %v861 = vxor.u32 %v792, 2147483648
        %v862 = vxor.u32 %v796, 2147483648
        %v863 = vxor.u32 %v800, 2147483648
        %v864 = vxor.u32 %v804, 2147483648
        %v865 = vmul.f32 %v861, 1.442695
        %v866 = vpow.pop %v865
        %v867 = vmul.f32 %v862, 1.442695
        %v868 = vpow.pop %v867
        %v869 = vmul.f32 %v863, 1.442695
        %v870 = vpow.pop %v869
        %v871 = vmul.f32 %v864, 1.442695
        %v872 = vpow.pop %v871
        %v873 = vadd.f32 %v866, 1.0
        %v874 = vadd.f32 %v868, 1.0
        %v875 = vadd.f32 %v870, 1.0
        %v876 = vadd.f32 %v872, 1.0
        %v877 = vrcp.pop %v873
        %v878 = vmul.f32 1.0, %v877
        %v879 = vrcp.pop %v874
        %v880 = vmul.f32 1.0, %v879
        %v881 = vrcp.pop %v875
        %v882 = vmul.f32 1.0, %v881
        %v883 = vrcp.pop %v876
        %v884 = vmul.f32 1.0, %v883
        %vm889 = vcmask 1040384
        %v890 = vrot.slane %v822, 7
        %v891 = vrot.slane %v824, 7
        %v892 = vsel %vm889, %v890, %v891
        %v893 = vrot.slane %v826, 7
        %v894 = vrot.slane %v828, 7
        %v895 = vsel %vm889, %v893, %v894
        %v900 = vsel %vm889, 1.0, %v890
        %v901 = vsel %vm889, 1.0, %v893
        %v906 = vrot.slane %v857, 7
        %v907 = vrot.slane %v858, 7
        %v908 = vsel %vm889, %v906, %v907
        %v909 = vrot.slane %v859, 7
        %v910 = vrot.slane %v860, 7
        %v911 = vsel %vm889, %v909, %v910
        %v916 = vsel %vm889, 0.0, %v906
        %v917 = vsel %vm889, 0.0, %v909
        %v918 = vmul.f32 %v822, %v900
        %v919 = vmul.f32 %v824, %v892
        %v920 = vmul.f32 %v826, %v901
        %v921 = vmul.f32 %v828, %v895
        %v922 = vmul.f32 %v822, %v916
        %v923 = vmul.f32 %v824, %v908
        %v924 = vmul.f32 %v826, %v917
        %v925 = vmul.f32 %v828, %v911
        %v926 = vadd.f32 %v922, %v857
        %v927 = vadd.f32 %v923, %v858
        %v928 = vadd.f32 %v924, %v859
        %v929 = vadd.f32 %v925, %v860
        %vm934 = vcmask 1041408
        %v935 = vrot.slane %v918, 6
        %v936 = vrot.slane %v919, 6
        %v937 = vsel %vm934, %v935, %v936
        %v938 = vrot.slane %v920, 6
        %v939 = vrot.slane %v921, 6
        %v940 = vsel %vm934, %v938, %v939
        %v945 = vsel %vm934, 1.0, %v935
        %v946 = vsel %vm934, 1.0, %v938
        %v951 = vrot.slane %v926, 6
        %v952 = vrot.slane %v927, 6
        %v953 = vsel %vm934, %v951, %v952
        %v954 = vrot.slane %v928, 6
        %v955 = vrot.slane %v929, 6
        %v956 = vsel %vm934, %v954, %v955
        %v961 = vsel %vm934, 0.0, %v951
        %v962 = vsel %vm934, 0.0, %v954
        %v963 = vmul.f32 %v918, %v945
        %v964 = vmul.f32 %v919, %v937
        %v965 = vmul.f32 %v920, %v946
        %v966 = vmul.f32 %v921, %v940
        %v967 = vmul.f32 %v918, %v961
        %v968 = vmul.f32 %v919, %v953
        %v969 = vmul.f32 %v920, %v962
        %v970 = vmul.f32 %v921, %v956
        %v971 = vadd.f32 %v967, %v926
        %v972 = vadd.f32 %v968, %v927
        %v973 = vadd.f32 %v969, %v928
        %v974 = vadd.f32 %v970, %v929
        %vm979 = vcmask 1043456
        %v980 = vrot.slane %v963, 4
        %v981 = vrot.slane %v964, 4
        %v982 = vsel %vm979, %v980, %v981
        %v983 = vrot.slane %v965, 4
        %v984 = vrot.slane %v966, 4
        %v985 = vsel %vm979, %v983, %v984
        %v990 = vsel %vm979, 1.0, %v980
        %v991 = vsel %vm979, 1.0, %v983
        %v996 = vrot.slane %v971, 4
        %v997 = vrot.slane %v972, 4
        %v998 = vsel %vm979, %v996, %v997
        %v999 = vrot.slane %v973, 4
        %v1000 = vrot.slane %v974, 4
        %v1001 = vsel %vm979, %v999, %v1000
        %v1006 = vsel %vm979, 0.0, %v996
        %v1007 = vsel %vm979, 0.0, %v999
        %v1008 = vmul.f32 %v963, %v990
        %v1009 = vmul.f32 %v964, %v982
        %v1010 = vmul.f32 %v965, %v991
        %v1011 = vmul.f32 %v966, %v985
        %v1012 = vmul.f32 %v963, %v1006
        %v1013 = vmul.f32 %v964, %v998
        %v1014 = vmul.f32 %v965, %v1007
        %v1015 = vmul.f32 %v966, %v1001
        %v1016 = vadd.f32 %v1012, %v971
        %v1017 = vadd.f32 %v1013, %v972
        %v1018 = vadd.f32 %v1014, %v973
        %v1019 = vadd.f32 %v1015, %v974
        %v1020 = vmul.f32 %v1009, %v1008
        %v1021 = vmul.f32 %v1011, %v1010
        %v1022 = vmul.f32 %v1008, 0.0
        %v1023 = vmul.f32 %v1009, %v1016
        %v1024 = vmul.f32 %v1010, 0.0
        %v1025 = vmul.f32 %v1011, %v1018
        %v1026 = vadd.f32 %v1022, %v1016
        %v1027 = vadd.f32 %v1023, %v1017
        %v1028 = vadd.f32 %v1024, %v1018
        %v1029 = vadd.f32 %v1025, %v1019
        %v1030 = vld [vmem:[%s418] sm:$0x1]
        %v1031 = vld [vmem:[%s418 + $0x1] sm:$0x1]
        %v1034 = vlaneseq
        %v1035 = vshrl.u32 %v1034, 7
        %v1036 = vsub.s32 0, %v1035
        %v1037 = vrot.slane %v1030, %v1036
        %v1038 = vlaneseq
        %v1039 = vshrl.u32 %v1038, 7
        %v1040 = vsub.s32 0, %v1039
        %v1041 = vrot.slane %v1031, %v1040
        %v1044 = vmul.f32 %v1008, %v1037
        %v1045 = vmul.f32 %v1020, %v1037
        %v1046 = vmul.f32 %v1010, %v1041
        %v1047 = vmul.f32 %v1021, %v1041
        %v1048 = vadd.f32 %v1044, %v1026
        %v1049 = vadd.f32 %v1045, %v1027
        %v1050 = vadd.f32 %v1046, %v1028
        %v1051 = vadd.f32 %v1047, %v1029
        %v1052 = vtanh.pop %v1048
        %v1053 = vtanh.pop %v1049
        %v1054 = vtanh.pop %v1050
        %v1055 = vtanh.pop %v1051
        %v1056 = vmul.f32 %v1052, %v878
        %v1057 = vmul.f32 %v1053, %v880
        %v1058 = vmul.f32 %v1054, %v882
        %v1059 = vmul.f32 %v1055, %v884
        %v1060 = vadd.f32 %v1056, %v423
        %v1061 = vadd.f32 %v1057, %v424
        %v1062 = vadd.f32 %v1058, %v425
        %v1063 = vadd.f32 %v1059, %v426
        %v1064 = vld [vmem:[%s5] sm:$0x1]
        %v1065 = vmul.f32 %v1060, %v1060
        %v1066 = vmul.f32 %v1061, %v1061
        %v1067 = vmul.f32 %v1062, %v1062
        %v1068 = vmul.f32 %v1063, %v1063
        %1069 = vadd.xlane.f32.xlu0 %v1065
        %v1070 = vpop.xlane.xlu0 %1069
        %1071 = vadd.xlane.f32.xlu0 %v1066
        %v1072 = vpop.xlane.xlu0 %1071
        %1073 = vadd.xlane.f32.xlu0 %v1067
        %v1074 = vpop.xlane.xlu0 %1073
        %1075 = vadd.xlane.f32.xlu0 %v1068
        %v1076 = vpop.xlane.xlu0 %1075
        %v1077 = vmul.f32 %v1070, %v440
        %v1078 = vmul.f32 %v1072, %v440
        %v1079 = vmul.f32 %v1074, %v440
        %v1080 = vmul.f32 %v1076, %v440
        %v1081 = vadd.f32 %v1077, 1e-06
        %v1082 = vadd.f32 %v1078, 1e-06
        %v1083 = vadd.f32 %v1079, 1e-06
        %v1084 = vadd.f32 %v1080, 1e-06
        %v1085 = vrsqrt.pop %v1081
        %v1086 = vrsqrt.pop %v1082
        %v1087 = vrsqrt.pop %v1083
        %v1088 = vrsqrt.pop %v1084
        %v1089 = vmul.f32 %v1060, %v1085
        %v1090 = vmul.f32 %v1061, %v1086
        %v1091 = vmul.f32 %v1062, %v1087
        %v1092 = vmul.f32 %v1063, %v1088
        %v1094 = vlaneseq
        %v1095 = vshrl.u32 %v1094, 7
        %v1096 = vsub.s32 0, %v1095
        %v1097 = vrot.slane %v1064, %v1096
        %v1099 = vmul.f32 %v1089, %v1097
        %v1100 = vmul.f32 %v1090, %v1097
        %v1101 = vmul.f32 %v1091, %v1097
        %v1102 = vmul.f32 %v1092, %v1097
        %v1103 = vpack.c.bf16 %v1100, %v1099
        %v1104 = vpack.c.bf16 %v1102, %v1101
        %v1105 = vld [vmem:[%s6] sm:$0xff]
        %v1106 = vld [vmem:[%s6 + $0x8] sm:$0xff]
        %v1107 = vld [vmem:[%s6 + $0x10] sm:$0xff]
        %v1108 = vld [vmem:[%s6 + $0x18] sm:$0xff]
        %v1109 = vld [vmem:[%s6 + $0x20] sm:$0xff]
        %v1110 = vld [vmem:[%s6 + $0x28] sm:$0xff]
        %v1111 = vld [vmem:[%s6 + $0x30] sm:$0xff]
        %v1112 = vld [vmem:[%s6 + $0x38] sm:$0xff]
        %v1113 = vld [vmem:[%s6 + $0x40] sm:$0xff]
        %v1114 = vld [vmem:[%s6 + $0x48] sm:$0xff]
        %v1115 = vld [vmem:[%s6 + $0x50] sm:$0xff]
        %v1116 = vld [vmem:[%s6 + $0x58] sm:$0xff]
        %v1117 = vld [vmem:[%s6 + $0x60] sm:$0xff]
        %v1118 = vld [vmem:[%s6 + $0x68] sm:$0xff]
        %v1119 = vld [vmem:[%s6 + $0x70] sm:$0xff]
        %v1120 = vld [vmem:[%s6 + $0x78] sm:$0xff]
        %v1121 = vld [vmem:[%s6 + $0x80] sm:$0xff]
        %v1122 = vld [vmem:[%s6 + $0x88] sm:$0xff]
        %v1123 = vld [vmem:[%s6 + $0x90] sm:$0xff]
        %v1124 = vld [vmem:[%s6 + $0x98] sm:$0xff]
        %v1125 = vld [vmem:[%s6 + $0xa0] sm:$0xff]
        %v1126 = vld [vmem:[%s6 + $0xa8] sm:$0xff]
        %v1127 = vld [vmem:[%s6 + $0xb0] sm:$0xff]
        %v1128 = vld [vmem:[%s6 + $0xb8] sm:$0xff]
        %v1129 = vld [vmem:[%s6 + $0xc0] sm:$0xff]
        %v1130 = vld [vmem:[%s6 + $0xc8] sm:$0xff]
        %v1131 = vld [vmem:[%s6 + $0xd0] sm:$0xff]
        %v1132 = vld [vmem:[%s6 + $0xd8] sm:$0xff]
        %v1133 = vld [vmem:[%s6 + $0xe0] sm:$0xff]
        %v1134 = vld [vmem:[%s6 + $0xe8] sm:$0xff]
        %v1135 = vld [vmem:[%s6 + $0xf0] sm:$0xff]
        %v1136 = vld [vmem:[%s6 + $0xf8] sm:$0xff]
        %v1169 = vunpack.c.l.b16 %v1105
        %v1170 = vunpack.c.h.b16 %v1105
        %v1171 = vunpack.c.l.b16 %v1106
        %v1172 = vunpack.c.h.b16 %v1106
        %v1173 = vunpack.c.l.b16 %v1107
        %v1174 = vunpack.c.h.b16 %v1107
        %v1175 = vunpack.c.l.b16 %v1108
        %v1176 = vunpack.c.h.b16 %v1108
        %v1177 = vunpack.c.l.b16 %v1109
        %v1178 = vunpack.c.h.b16 %v1109
        %v1179 = vunpack.c.l.b16 %v1110
        %v1180 = vunpack.c.h.b16 %v1110
        %v1181 = vunpack.c.l.b16 %v1111
        %v1182 = vunpack.c.h.b16 %v1111
        %v1183 = vunpack.c.l.b16 %v1112
        %v1184 = vunpack.c.h.b16 %v1112
        %v1185 = vunpack.c.l.b16 %v1113
        %v1186 = vunpack.c.h.b16 %v1113
        %v1187 = vunpack.c.l.b16 %v1114
        %v1188 = vunpack.c.h.b16 %v1114
        %v1189 = vunpack.c.l.b16 %v1115
        %v1190 = vunpack.c.h.b16 %v1115
        %v1191 = vunpack.c.l.b16 %v1116
        %v1192 = vunpack.c.h.b16 %v1116
        %v1193 = vunpack.c.l.b16 %v1117
        %v1194 = vunpack.c.h.b16 %v1117
        %v1195 = vunpack.c.l.b16 %v1118
        %v1196 = vunpack.c.h.b16 %v1118
        %v1197 = vunpack.c.l.b16 %v1119
        %v1198 = vunpack.c.h.b16 %v1119
        %v1199 = vunpack.c.l.b16 %v1120
        %v1200 = vunpack.c.h.b16 %v1120
        %v1201 = vunpack.c.l.b16 %v1121
        %v1202 = vunpack.c.h.b16 %v1121
        %v1203 = vunpack.c.l.b16 %v1122
        %v1204 = vunpack.c.h.b16 %v1122
        %v1205 = vunpack.c.l.b16 %v1123
        %v1206 = vunpack.c.h.b16 %v1123
        %v1207 = vunpack.c.l.b16 %v1124
        %v1208 = vunpack.c.h.b16 %v1124
        %v1209 = vunpack.c.l.b16 %v1125
        %v1210 = vunpack.c.h.b16 %v1125
        %v1211 = vunpack.c.l.b16 %v1126
        %v1212 = vunpack.c.h.b16 %v1126
        %v1213 = vunpack.c.l.b16 %v1127
        %v1214 = vunpack.c.h.b16 %v1127
        %v1215 = vunpack.c.l.b16 %v1128
        %v1216 = vunpack.c.h.b16 %v1128
        %v1217 = vunpack.c.l.b16 %v1129
        %v1218 = vunpack.c.h.b16 %v1129
        %v1219 = vunpack.c.l.b16 %v1130
        %v1220 = vunpack.c.h.b16 %v1130
        %v1221 = vunpack.c.l.b16 %v1131
        %v1222 = vunpack.c.h.b16 %v1131
        %v1223 = vunpack.c.l.b16 %v1132
        %v1224 = vunpack.c.h.b16 %v1132
        %v1225 = vunpack.c.l.b16 %v1133
        %v1226 = vunpack.c.h.b16 %v1133
        %v1227 = vunpack.c.l.b16 %v1134
        %v1228 = vunpack.c.h.b16 %v1134
        %v1229 = vunpack.c.l.b16 %v1135
        %v1230 = vunpack.c.h.b16 %v1135
        %v1231 = vunpack.c.l.b16 %v1136
        %v1232 = vunpack.c.h.b16 %v1136
        %v1233 = vpack.c.b16 %v1173, %v1169
        %v1234 = vpack.c.b16 %v1174, %v1170
        %v1235 = vpack.c.b16 %v1175, %v1171
        %v1236 = vpack.c.b16 %v1176, %v1172
        %v1237 = vpack.c.b16 %v1181, %v1177
        %v1238 = vpack.c.b16 %v1182, %v1178
        %v1239 = vpack.c.b16 %v1183, %v1179
        %v1240 = vpack.c.b16 %v1184, %v1180
        %v1241 = vpack.c.b16 %v1189, %v1185
        %v1242 = vpack.c.b16 %v1190, %v1186
        %v1243 = vpack.c.b16 %v1191, %v1187
        %v1244 = vpack.c.b16 %v1192, %v1188
        %v1245 = vpack.c.b16 %v1197, %v1193
        %v1246 = vpack.c.b16 %v1198, %v1194
        %v1247 = vpack.c.b16 %v1199, %v1195
        %v1248 = vpack.c.b16 %v1200, %v1196
        %v1249 = vpack.c.b16 %v1205, %v1201
        %v1250 = vpack.c.b16 %v1206, %v1202
        %v1251 = vpack.c.b16 %v1207, %v1203
        %v1252 = vpack.c.b16 %v1208, %v1204
        %v1253 = vpack.c.b16 %v1213, %v1209
        %v1254 = vpack.c.b16 %v1214, %v1210
        %v1255 = vpack.c.b16 %v1215, %v1211
        %v1256 = vpack.c.b16 %v1216, %v1212
        %v1257 = vpack.c.b16 %v1221, %v1217
        %v1258 = vpack.c.b16 %v1222, %v1218
        %v1259 = vpack.c.b16 %v1223, %v1219
        %v1260 = vpack.c.b16 %v1224, %v1220
        %v1261 = vpack.c.b16 %v1229, %v1225
        %v1262 = vpack.c.b16 %v1230, %v1226
        %v1263 = vpack.c.b16 %v1231, %v1227
        %v1264 = vpack.c.b16 %v1232, %v1228
        %1297 = vmatprep.subr.bf16.mxu0 %v1262
        %1298 = vmatpush1.bf16.msra.mxu0 %v1261
        %1299 = vmatprep.subr.bf16.mxu0 %v1258
        %1300 = vmatpush1.bf16.msra.mxu0 %v1257
        %1301 = vmatprep.subr.bf16.mxu0 %v1254
        %1302 = vmatpush1.bf16.msra.mxu0 %v1253
        %1303 = vmatprep.subr.bf16.mxu0 %v1250
        %1304 = vmatpush1.bf16.msra.mxu0 %v1249
        %1305 = vmatprep.subr.bf16.mxu0 %v1246
        %1306 = vmatpush1.bf16.msra.mxu0 %v1245
        %1307 = vmatprep.subr.bf16.mxu0 %v1242
        %1308 = vmatpush1.bf16.msra.mxu0 %v1241
        %1309 = vmatprep.subr.bf16.mxu0 %v1238
        %1310 = vmatpush1.bf16.msra.mxu0 %v1237
        %1311 = vmatprep.subr.bf16.mxu0 %v1234
        %1312 = vmatpush1.bf16.msra.mxu0 %v1233
        %1313 = vmatprep.subr.bf16.mxu0 0
        %1314 = vmatpush2.bf16.msra.mxu0 0
        %1315 = vmatprep.subr.bf16.mxu0 0
        %1316 = vmatpush2.bf16.msra.mxu0 0
        %1317 = vmatprep.subr.bf16.mxu0 0
        %1318 = vmatpush2.bf16.msra.mxu0 0
        %1319 = vmatprep.subr.bf16.mxu0 0
        %1320 = vmatpush2.bf16.msra.mxu0 0
        %1321 = vmatprep.subr.bf16.mxu0 0
        %1322 = vmatpush2.bf16.msra.mxu0 0
        %1323 = vmatprep.subr.bf16.mxu0 0
        %1324 = vmatpush2.bf16.msra.mxu0 0
        %1325 = vmatprep.subr.bf16.mxu0 0
        %1326 = vmatpush2.bf16.msra.mxu0 0
        %1327 = vmatprep.subr.bf16.mxu0 0
        %1328 = vmatpush2.bf16.msra.mxu0 0
        %1329 = vmatprep.mubr.bf16.mxu0 0
        %1330 = vmatmul.mubr.bf16.gmra.mxu0 %v1103
        %v1331 = vpop.f32.mrf.mxu0
        %v1332 = vadd.f32 0.0, %v1331
        %v1333 = vpop.f32.mrf.mxu0
        %v1334 = vadd.f32 0.0, %v1333
        %v1335 = vpop.f32.mrf.mxu0
        %v1336 = vadd.f32 0.0, %v1335
        %v1337 = vpop.f32.mrf.mxu0
        %v1338 = vadd.f32 0.0, %v1337
        %1339 = vmatprep.mubr.bf16.mxu0 0
        %1340 = vmatmul.mubr.bf16.gmra.mxu0 %v1104
        %v1341 = vpop.f32.mrf.mxu0
        %v1342 = vadd.f32 0.0, %v1341
        %v1343 = vpop.f32.mrf.mxu0
        %v1344 = vadd.f32 0.0, %v1343
        %v1345 = vpop.f32.mrf.mxu0
        %v1346 = vadd.f32 0.0, %v1345
        %v1347 = vpop.f32.mrf.mxu0
        %v1348 = vadd.f32 0.0, %v1347
        %1349 = vdwg.mxu0
        %1350 = vmatprep.subr.bf16.mxu0 %v1264
        %1351 = vmatpush1.bf16.msra.mxu0 %v1263
        %1352 = vmatprep.subr.bf16.mxu0 %v1260
        %1353 = vmatpush1.bf16.msra.mxu0 %v1259
        %1354 = vmatprep.subr.bf16.mxu0 %v1256
        %1355 = vmatpush1.bf16.msra.mxu0 %v1255
        %1356 = vmatprep.subr.bf16.mxu0 %v1252
        %1357 = vmatpush1.bf16.msra.mxu0 %v1251
        %1358 = vmatprep.subr.bf16.mxu0 %v1248
        %1359 = vmatpush1.bf16.msra.mxu0 %v1247
        %1360 = vmatprep.subr.bf16.mxu0 %v1244
        %1361 = vmatpush1.bf16.msra.mxu0 %v1243
        %1362 = vmatprep.subr.bf16.mxu0 %v1240
        %1363 = vmatpush1.bf16.msra.mxu0 %v1239
        %1364 = vmatprep.subr.bf16.mxu0 %v1236
        %1365 = vmatpush1.bf16.msra.mxu0 %v1235
        %1366 = vmatprep.subr.bf16.mxu0 0
        %1367 = vmatpush2.bf16.msra.mxu0 0
        %1368 = vmatprep.subr.bf16.mxu0 0
        %1369 = vmatpush2.bf16.msra.mxu0 0
        %1370 = vmatprep.subr.bf16.mxu0 0
        %1371 = vmatpush2.bf16.msra.mxu0 0
        %1372 = vmatprep.subr.bf16.mxu0 0
        %1373 = vmatpush2.bf16.msra.mxu0 0
        %1374 = vmatprep.subr.bf16.mxu0 0
        %1375 = vmatpush2.bf16.msra.mxu0 0
        %1376 = vmatprep.subr.bf16.mxu0 0
        %1377 = vmatpush2.bf16.msra.mxu0 0
        %1378 = vmatprep.subr.bf16.mxu0 0
        %1379 = vmatpush2.bf16.msra.mxu0 0
        %1380 = vmatprep.subr.bf16.mxu0 0
        %1381 = vmatpush2.bf16.msra.mxu0 0
        %1382 = vmatprep.mubr.bf16.mxu0 0
        %1383 = vmatmul.mubr.bf16.gmra.mxu0 %v1103
        %v1384 = vpop.f32.mrf.mxu0
        %v1385 = vadd.f32 0.0, %v1384
        %v1386 = vpop.f32.mrf.mxu0
        %v1387 = vadd.f32 0.0, %v1386
        %v1388 = vpop.f32.mrf.mxu0
        %v1389 = vadd.f32 0.0, %v1388
        %v1390 = vpop.f32.mrf.mxu0
        %v1391 = vadd.f32 0.0, %v1390
        %1392 = vmatprep.mubr.bf16.mxu0 0
        %1393 = vmatmul.mubr.bf16.gmra.mxu0 %v1104
        %v1394 = vpop.f32.mrf.mxu0
        %v1395 = vadd.f32 0.0, %v1394
        %v1396 = vpop.f32.mrf.mxu0
        %v1397 = vadd.f32 0.0, %v1396
        %v1398 = vpop.f32.mrf.mxu0
        %v1399 = vadd.f32 0.0, %v1398
        %v1400 = vpop.f32.mrf.mxu0
        %v1401 = vadd.f32 0.0, %v1400
        %1402 = vdwg.mxu0
        %v1403 = vld [vmem:[%s7] sm:$0xf]
        %v1405 = vlaneseq
        %v1406 = vshrl.u32 %v1405, 7
        %v1407 = vsub.s32 0, %v1406
        %v1408 = vrot.slane %v1403, %v1407
        %v1409 = vlaneseq
        %v1410 = vshrl.u32 %v1409, 7
        %v1411 = vsub.s32 1, %v1410
        %v1412 = vrot.slane %v1403, %v1411
        %v1413 = vlaneseq
        %v1414 = vshrl.u32 %v1413, 7
        %v1415 = vsub.s32 2, %v1414
        %v1416 = vrot.slane %v1403, %v1415
        %v1417 = vlaneseq
        %v1418 = vshrl.u32 %v1417, 7
        %v1419 = vsub.s32 3, %v1418
        %v1420 = vrot.slane %v1403, %v1419
        %v1425 = vadd.f32 %v1332, %v1408
        %v1426 = vadd.f32 %v1334, %v1412
        %v1427 = vadd.f32 %v1385, %v1416
        %v1428 = vadd.f32 %v1387, %v1420
        %v1429 = vadd.f32 %v1336, %v1408
        %v1430 = vadd.f32 %v1338, %v1412
        %v1431 = vadd.f32 %v1389, %v1416
        %v1432 = vadd.f32 %v1391, %v1420
        %v1433 = vadd.f32 %v1342, %v1408
        %v1434 = vadd.f32 %v1344, %v1412
        %v1435 = vadd.f32 %v1395, %v1416
        %v1436 = vadd.f32 %v1397, %v1420
        %v1437 = vadd.f32 %v1346, %v1408
        %v1438 = vadd.f32 %v1348, %v1412
        %v1439 = vadd.f32 %v1399, %v1416
        %v1440 = vadd.f32 %v1401, %v1420
        %v1441 = vxor.u32 %v1427, 2147483648
        %v1442 = vxor.u32 %v1428, 2147483648
        %v1443 = vxor.u32 %v1431, 2147483648
        %v1444 = vxor.u32 %v1432, 2147483648
        %v1445 = vxor.u32 %v1435, 2147483648
        %v1446 = vxor.u32 %v1436, 2147483648
        %v1447 = vxor.u32 %v1439, 2147483648
        %v1448 = vxor.u32 %v1440, 2147483648
        %v1449 = vmul.f32 %v1441, 1.442695
        %v1450 = vpow.pop %v1449
        %v1451 = vmul.f32 %v1442, 1.442695
        %v1452 = vpow.pop %v1451
        %v1453 = vmul.f32 %v1443, 1.442695
        %v1454 = vpow.pop %v1453
        %v1455 = vmul.f32 %v1444, 1.442695
        %v1456 = vpow.pop %v1455
        %v1457 = vmul.f32 %v1445, 1.442695
        %v1458 = vpow.pop %v1457
        %v1459 = vmul.f32 %v1446, 1.442695
        %v1460 = vpow.pop %v1459
        %v1461 = vmul.f32 %v1447, 1.442695
        %v1462 = vpow.pop %v1461
        %v1463 = vmul.f32 %v1448, 1.442695
        %v1464 = vpow.pop %v1463
        %v1465 = vadd.f32 %v1450, 1.0
        %v1466 = vadd.f32 %v1452, 1.0
        %v1467 = vadd.f32 %v1454, 1.0
        %v1468 = vadd.f32 %v1456, 1.0
        %v1469 = vadd.f32 %v1458, 1.0
        %v1470 = vadd.f32 %v1460, 1.0
        %v1471 = vadd.f32 %v1462, 1.0
        %v1472 = vadd.f32 %v1464, 1.0
        %v1473 = vrcp.pop %v1465
        %v1474 = vmul.f32 1.0, %v1473
        %v1475 = vrcp.pop %v1466
        %v1476 = vmul.f32 1.0, %v1475
        %v1477 = vrcp.pop %v1467
        %v1478 = vmul.f32 1.0, %v1477
        %v1479 = vrcp.pop %v1468
        %v1480 = vmul.f32 1.0, %v1479
        %v1481 = vrcp.pop %v1469
        %v1482 = vmul.f32 1.0, %v1481
        %v1483 = vrcp.pop %v1470
        %v1484 = vmul.f32 1.0, %v1483
        %v1485 = vrcp.pop %v1471
        %v1486 = vmul.f32 1.0, %v1485
        %v1487 = vrcp.pop %v1472
        %v1488 = vmul.f32 1.0, %v1487
        %v1489 = vmul.f32 %v1427, %v1474
        %v1490 = vmul.f32 %v1428, %v1476
        %v1491 = vmul.f32 %v1431, %v1478
        %v1492 = vmul.f32 %v1432, %v1480
        %v1493 = vmul.f32 %v1435, %v1482
        %v1494 = vmul.f32 %v1436, %v1484
        %v1495 = vmul.f32 %v1439, %v1486
        %v1496 = vmul.f32 %v1440, %v1488
        %v1497 = vmul.f32 %v1425, %v1489
        %v1498 = vmul.f32 %v1426, %v1490
        %v1499 = vmul.f32 %v1429, %v1491
        %v1500 = vmul.f32 %v1430, %v1492
        %v1501 = vmul.f32 %v1433, %v1493
        %v1502 = vmul.f32 %v1434, %v1494
        %v1503 = vmul.f32 %v1437, %v1495
        %v1504 = vmul.f32 %v1438, %v1496
        %v1505 = vpack.c.bf16 %v1499, %v1497
        %v1506 = vpack.c.bf16 %v1500, %v1498
        %v1507 = vpack.c.bf16 %v1503, %v1501
        %v1508 = vpack.c.bf16 %v1504, %v1502
        %v1509 = vld [vmem:[%s8] sm:$0xf]
        %v1510 = vld [vmem:[%s8 + $0x4] sm:$0xf]
        %v1511 = vld [vmem:[%s8 + $0x8] sm:$0xf]
        %v1512 = vld [vmem:[%s8 + $0xc] sm:$0xf]
        %v1513 = vld [vmem:[%s8 + $0x10] sm:$0xf]
        %v1514 = vld [vmem:[%s8 + $0x14] sm:$0xf]
        %v1515 = vld [vmem:[%s8 + $0x18] sm:$0xf]
        %v1516 = vld [vmem:[%s8 + $0x1c] sm:$0xf]
        %v1517 = vld [vmem:[%s8 + $0x20] sm:$0xf]
        %v1518 = vld [vmem:[%s8 + $0x24] sm:$0xf]
        %v1519 = vld [vmem:[%s8 + $0x28] sm:$0xf]
        %v1520 = vld [vmem:[%s8 + $0x2c] sm:$0xf]
        %v1521 = vld [vmem:[%s8 + $0x30] sm:$0xf]
        %v1522 = vld [vmem:[%s8 + $0x34] sm:$0xf]
        %v1523 = vld [vmem:[%s8 + $0x38] sm:$0xf]
        %v1524 = vld [vmem:[%s8 + $0x3c] sm:$0xf]
        %v1525 = vld [vmem:[%s8 + $0x40] sm:$0xf]
        %v1526 = vld [vmem:[%s8 + $0x44] sm:$0xf]
        %v1527 = vld [vmem:[%s8 + $0x48] sm:$0xf]
        %v1528 = vld [vmem:[%s8 + $0x4c] sm:$0xf]
        %v1529 = vld [vmem:[%s8 + $0x50] sm:$0xf]
        %v1530 = vld [vmem:[%s8 + $0x54] sm:$0xf]
        %v1531 = vld [vmem:[%s8 + $0x58] sm:$0xf]
        %v1532 = vld [vmem:[%s8 + $0x5c] sm:$0xf]
        %v1533 = vld [vmem:[%s8 + $0x60] sm:$0xf]
        %v1534 = vld [vmem:[%s8 + $0x64] sm:$0xf]
        %v1535 = vld [vmem:[%s8 + $0x68] sm:$0xf]
        %v1536 = vld [vmem:[%s8 + $0x6c] sm:$0xf]
        %v1537 = vld [vmem:[%s8 + $0x70] sm:$0xf]
        %v1538 = vld [vmem:[%s8 + $0x74] sm:$0xf]
        %v1539 = vld [vmem:[%s8 + $0x78] sm:$0xf]
        %v1540 = vld [vmem:[%s8 + $0x7c] sm:$0xf]
        %v1573 = vunpack.c.l.b16 %v1509
        %v1574 = vunpack.c.l.b16 %v1510
        %v1575 = vunpack.c.l.b16 %v1511
        %v1576 = vunpack.c.l.b16 %v1512
        %v1577 = vunpack.c.l.b16 %v1513
        %v1578 = vunpack.c.l.b16 %v1514
        %v1579 = vunpack.c.l.b16 %v1515
        %v1580 = vunpack.c.l.b16 %v1516
        %v1581 = vunpack.c.l.b16 %v1517
        %v1582 = vunpack.c.l.b16 %v1518
        %v1583 = vunpack.c.l.b16 %v1519
        %v1584 = vunpack.c.l.b16 %v1520
        %v1585 = vunpack.c.l.b16 %v1521
        %v1586 = vunpack.c.l.b16 %v1522
        %v1587 = vunpack.c.l.b16 %v1523
        %v1588 = vunpack.c.l.b16 %v1524
        %v1589 = vunpack.c.l.b16 %v1525
        %v1590 = vunpack.c.l.b16 %v1526
        %v1591 = vunpack.c.l.b16 %v1527
        %v1592 = vunpack.c.l.b16 %v1528
        %v1593 = vunpack.c.l.b16 %v1529
        %v1594 = vunpack.c.l.b16 %v1530
        %v1595 = vunpack.c.l.b16 %v1531
        %v1596 = vunpack.c.l.b16 %v1532
        %v1597 = vunpack.c.l.b16 %v1533
        %v1598 = vunpack.c.l.b16 %v1534
        %v1599 = vunpack.c.l.b16 %v1535
        %v1600 = vunpack.c.l.b16 %v1536
        %v1601 = vunpack.c.l.b16 %v1537
        %v1602 = vunpack.c.l.b16 %v1538
        %v1603 = vunpack.c.l.b16 %v1539
        %v1604 = vunpack.c.l.b16 %v1540
        %v1605 = vpack.c.b16 %v1574, %v1573
        %v1606 = vpack.c.b16 %v1576, %v1575
        %v1607 = vpack.c.b16 %v1578, %v1577
        %v1608 = vpack.c.b16 %v1580, %v1579
        %v1609 = vpack.c.b16 %v1582, %v1581
        %v1610 = vpack.c.b16 %v1584, %v1583
        %v1611 = vpack.c.b16 %v1586, %v1585
        %v1612 = vpack.c.b16 %v1588, %v1587
        %v1613 = vpack.c.b16 %v1590, %v1589
        %v1614 = vpack.c.b16 %v1592, %v1591
        %v1615 = vpack.c.b16 %v1594, %v1593
        %v1616 = vpack.c.b16 %v1596, %v1595
        %v1617 = vpack.c.b16 %v1598, %v1597
        %v1618 = vpack.c.b16 %v1600, %v1599
        %v1619 = vpack.c.b16 %v1602, %v1601
        %v1620 = vpack.c.b16 %v1604, %v1603
        %1637 = vmatprep.subr.bf16.mxu0 0
        %1638 = vmatpush1.bf16.msra.mxu0 %v1612
        %1639 = vmatprep.subr.bf16.mxu0 0
        %1640 = vmatpush1.bf16.msra.mxu0 %v1611
        %1641 = vmatprep.subr.bf16.mxu0 0
        %1642 = vmatpush1.bf16.msra.mxu0 %v1610
        %1643 = vmatprep.subr.bf16.mxu0 0
        %1644 = vmatpush1.bf16.msra.mxu0 %v1609
        %1645 = vmatprep.subr.bf16.mxu0 0
        %1646 = vmatpush1.bf16.msra.mxu0 %v1608
        %1647 = vmatprep.subr.bf16.mxu0 0
        %1648 = vmatpush1.bf16.msra.mxu0 %v1607
        %1649 = vmatprep.subr.bf16.mxu0 0
        %1650 = vmatpush1.bf16.msra.mxu0 %v1606
        %1651 = vmatprep.subr.bf16.mxu0 0
        %1652 = vmatpush1.bf16.msra.mxu0 %v1605
        %1653 = vmatprep.subr.bf16.mxu0 0
        %1654 = vmatpush2.bf16.msra.mxu0 %v1620
        %1655 = vmatprep.subr.bf16.mxu0 0
        %1656 = vmatpush2.bf16.msra.mxu0 %v1619
        %1657 = vmatprep.subr.bf16.mxu0 0
        %1658 = vmatpush2.bf16.msra.mxu0 %v1618
        %1659 = vmatprep.subr.bf16.mxu0 0
        %1660 = vmatpush2.bf16.msra.mxu0 %v1617
        %1661 = vmatprep.subr.bf16.mxu0 0
        %1662 = vmatpush2.bf16.msra.mxu0 %v1616
        %1663 = vmatprep.subr.bf16.mxu0 0
        %1664 = vmatpush2.bf16.msra.mxu0 %v1615
        %1665 = vmatprep.subr.bf16.mxu0 0
        %1666 = vmatpush2.bf16.msra.mxu0 %v1614
        %1667 = vmatprep.subr.bf16.mxu0 0
        %1668 = vmatpush2.bf16.msra.mxu0 %v1613
        %1669 = vmatprep.mubr.bf16.mxu0 %v1506
        %1670 = vmatmul.mubr.bf16.gmra.mxu0 %v1505
        %v1671 = vpop.f32.mrf.mxu0
        %v1672 = vadd.f32 0.0, %v1671
        %v1673 = vpop.f32.mrf.mxu0
        %v1674 = vpop.f32.mrf.mxu0
        %v1675 = vadd.f32 0.0, %v1674
        %v1676 = vpop.f32.mrf.mxu0
        %1677 = vmatprep.mubr.bf16.mxu0 %v1508
        %1678 = vmatmul.mubr.bf16.gmra.mxu0 %v1507
        %v1679 = vpop.f32.mrf.mxu0
        %v1680 = vadd.f32 0.0, %v1679
        %v1681 = vpop.f32.mrf.mxu0
        %v1682 = vpop.f32.mrf.mxu0
        %v1683 = vadd.f32 0.0, %v1682
        %v1684 = vpop.f32.mrf.mxu0
        %1685 = vdwg.mxu0
        %v1686 = vld [vmem:[%s9] sm:$0x1]
        %v1688 = vlaneseq
        %v1689 = vshrl.u32 %v1688, 7
        %v1690 = vsub.s32 0, %v1689
        %v1691 = vrot.slane %v1686, %v1690
        %v1693 = vadd.f32 %v1672, %v1691
        %v1694 = vadd.f32 %v1675, %v1691
        %v1695 = vadd.f32 %v1680, %v1691
        %v1696 = vadd.f32 %v1683, %v1691
        %v1697 = vadd.f32 %v1693, %v1060
        %v1698 = vadd.f32 %v1694, %v1061
        %v1699 = vadd.f32 %v1695, %v1062
        %v1700 = vadd.f32 %v1696, %v1063
        %1701 = vst [vmem:[%s400] sm:$0xff] %v1697
        %1702 = vst [vmem:[%s400 + $0x8] sm:$0xff] %v1698
        %1703 = vst [vmem:[%s400 + $0x10] sm:$0xff] %v1699
        %1704 = vst [vmem:[%s400 + $0x18] sm:$0xff] %v1700
        %1705 = vst [vmem:[%s407 - $0x7] sm:$0x80] %v1049
        %1706 = vst [vmem:[%s407 - $0x6] sm:$0x80] %v1051
        %s1707 = sand.u32 %s257, 1
        %s1708 = scalar_lea.sflag [#allocation3], %s1707
        %s1709 = sand.u32 %s257, 1
        %s1710 = smul.addr %s1709, 32
        %s1711 = scalar_lea.vmem [#allocation2], %s1710
        %s1712 = sand.u32 %s283, 1
        %s1713 = scalar_lea.sflag [#allocation5], %s1712
        %s1714 = sand.u32 %s283, 1
        %s1715 = smul.addr %s1714, 2
        %s1716 = scalar_lea.vmem [#allocation4], %s1715
        // Predicated region
        $region61: #{qlstm_block_forward.1} parent=59 // pred_check
          %p1717 = pneg %p267
        $region62: #{qlstm_block_forward.1} parent=59 // pred_check_branch
          %1719 = sbr.rel (%p1717) target = $region64
        $region63: #{qlstm_block_forward.1} parent=59 // pred_region
          %s1720 = smul.u32 2, %s29
          %s1722 = ssub.s32 512, 512
          %1723 = vsyncadd %s1708, %s1722
          %s1724 = smul.addr %s1720, 2
          %s1725 = smul.addr %s1724, 128
          %s1726 = scalar_lea.hbm %s10, %s1725
          %s1727 = sshll.u32 %s1711, 4
          %s1728 = int_to_ptr.vmem [resolvable:$true] %s1727
          %1733 = dma.vmem_to_hbm [thread:$0]  %s1728, 512, %s1726, %s1708, 128, 128, 8
        $region64: #{qlstm_block_forward.1} parent=59 // pred_fallthru
          _
        // Predicated region
        $region65: #{qlstm_block_forward.1} parent=59 // pred_check
          %p1734 = pneg %p293
        $region66: #{qlstm_block_forward.1} parent=59 // pred_check_branch
          %1736 = sbr.rel (%p1734) target = $region68
        $region67: #{qlstm_block_forward.1} parent=59 // pred_region
          %s1737 = smul.u32 2, %s29
          %s1739 = ssub.s32 32, 32
          %1740 = vsyncadd %s1713, %s1739
          %s1741 = smul.addr %s1737, 16
          %s1742 = scalar_lea.hbm %s11, %s1741
          %s1743 = sshll.u32 %s1716, 4
          %s1744 = int_to_ptr.vmem [resolvable:$true] %s1743
          %1749 = dma.vmem_to_hbm [thread:$0]  %s1744, 32, %s1742, %s1713, 16, 16, 1
        $region68: #{qlstm_block_forward.1} parent=59 // pred_fallthru
          _
      $region60: #{qlstm_block_forward.1} parent=5 // pred_fallthru
        _
      %p1750 = scmp.le.s32.totalorder 2, %s24
      // Predicated region
      $region69: #{qlstm_block_forward.1} parent=5 // pred_check
        %p1751 = pneg %p1750
      $region70: #{qlstm_block_forward.1} parent=5 // pred_check_branch
        %1753 = sbr.rel (%p1751) target = $region72
      $region71: #{qlstm_block_forward.1} parent=5 // pred_region
        %s1754 = ssub.s32 %s24, 2
        // Predicated region
        $region73: #{qlstm_block_forward.1} parent=71 // pred_check
          %p1755 = pneg %p273
        $region74: #{qlstm_block_forward.1} parent=71 // pred_check_branch
          %1757 = sbr.rel (%p1755) target = $region76
        $region75: #{qlstm_block_forward.1} parent=71 // pred_region
          %s1758 = sand.u32 %s258, 1
          %s1759 = scalar_lea.sflag [#allocation3], %s1758
          %s1760 = sand.u32 %s258, 1
          %s1761 = smul.addr %s1760, 32
          %s1762 = scalar_lea.vmem [#allocation2], %s1761
          %1763 = dma.done %s1759, 512
        $region76: #{qlstm_block_forward.1} parent=71 // pred_fallthru
          _
        // Predicated region
        $region77: #{qlstm_block_forward.1} parent=71 // pred_check
          %p1764 = pneg %p299
        $region78: #{qlstm_block_forward.1} parent=71 // pred_check_branch
          %1766 = sbr.rel (%p1764) target = $region80
        $region79: #{qlstm_block_forward.1} parent=71 // pred_region
          %s1767 = sand.u32 %s284, 1
          %s1768 = scalar_lea.sflag [#allocation5], %s1767
          %s1769 = sand.u32 %s284, 1
          %s1770 = smul.addr %s1769, 2
          %s1771 = scalar_lea.vmem [#allocation4], %s1770
          %1772 = dma.done %s1768, 32
        $region80: #{qlstm_block_forward.1} parent=71 // pred_fallthru
          _
      $region72: #{qlstm_block_forward.1} parent=5 // pred_fallthru
        _
    $region6: #{qlstm_block_forward.1} parent=1 // loop_footer
      %s28 = sadd.s32 1, %s24
    $region7: #{qlstm_block_forward.1} parent=1 // loop_footer_branch
      %23 = sbr.rel target = $region3
    $region8: #{qlstm_block_forward.1} parent=1 // loop_exit
      _
    %1773 = vsyncpa [#allocation3], 1
    %s1774 = scalar_lea.sflag [#allocation3], 1
    %1775 = vsyncpa %s1774, 1
    %1776 = vsyncpa [#allocation5], 1
    %s1777 = scalar_lea.sflag [#allocation5], 1
    %1778 = vsyncpa %s1777, 1

</llo_original>
